<compile_context>
chip_gen: v7x
topology: tpu7x:2x2x1
jax: 0.10.0
libtpu: 0.0.40
codegen_flags: <defaults>
</compile_context>

<pallas_src>
import math
import functools

import jax
import jax.numpy as jnp
from jax.experimental import pallas as pl
from jax.experimental.pallas import tpu as pltpu


def _round_up(a, b):
    return -(-a // b) * b


def _pe_kernel(x_ref, o_ref, *, freq_num, scale):
    """x_ref: (br, C) flat slab.  o_ref: (1 + 2*freq_num, br, C) channel-major."""
    out_dtype = o_ref.dtype

    x_nat = x_ref[...]
    # Passthrough channel straight from the input (no f32 round-trip cast).
    o_ref[0, :, :] = x_nat if x_nat.dtype == out_dtype else x_nat.astype(out_dtype)

    # Range-reduction / recurrence in f32.
    x = x_nat if x_nat.dtype == jnp.float32 else x_nat.astype(jnp.float32)
    base = (math.pi / scale) * x                  # base-frequency argument (VPU)
    s = jnp.sin(base)                             # EUP/VPU polynomial, once
    c = jnp.cos(base)

    def cast(v):
        return v if v.dtype == out_dtype else v.astype(out_dtype)

    o_ref[1, :, :] = cast(s)
    o_ref[2, :, :] = cast(c)
    for k in range(1, freq_num):                  # freqs are 2**k -> double-angle
        s, c = 2.0 * s * c, 1.0 - 2.0 * (s * s)   # VPU-only recurrence
        o_ref[1 + 2 * k, :, :] = cast(s)
        o_ref[2 + 2 * k, :, :] = cast(c)


def positional_encoding(x, freq_num=1, scale=1.0, *, lane_cols=512,
                        channel_major=False, min_pallas_elements=4096):
    """x: (..., D) float array.

    Returns (..., D*(1+2*freq_num)) in torch cat order by default, or the
    channel-major (1+2*freq_num, ..., D) layout when channel_major=True (no
    interleave transpose; preferred for fused consumers).
    """
    if freq_num == 0:
        return x

    d = x.shape[-1]
    nchan = 1 + 2 * freq_num
    d_out = d * nchan
    lead = x.shape[:-1]
    n = math.prod(lead) if lead else 1
    N = n * d
    dtype = x.dtype

    # ---- Small-N fast path: plain jnp, fuses with the consumer in XLA. ----
    if N < min_pallas_elements:
        x32 = x.astype(jnp.float32)
        chans = [x]
        for k in range(freq_num):
            f = (2.0 ** k) * math.pi / scale
            chans.append(jnp.sin(f * x32).astype(dtype))
            chans.append(jnp.cos(f * x32).astype(dtype))
        if channel_major:
            return jnp.stack(chans, axis=0)            # (nchan,) + lead + (d,)
        return jnp.concatenate(chans, axis=-1)         # torch cat order

    # ---- Pallas path: lane-dense slabs, channel-major stores. ----
    itemsize = jnp.dtype(dtype).itemsize
    sub = max(8, 32 // itemsize)        # sublane tile: 8 f32 / 16 bf16 / 32 int8
    C = lane_cols                       # multiple of 128 (lane-dense)
    R = pl.cdiv(N, C)                   # rows of the flat (R, C) input view

    # Per-chip VMEM sizing (double-buffered input + channel-major output blocks).
    try:
        vmem_cap = int(getattr(pltpu.get_tpu_info(), "vmem_capacity_bytes",
                               64 << 20))
    except Exception:
        vmem_cap = 64 << 20                               # v7x-conservative
    vmem_budget = min(24 << 20, max(8 << 20, vmem_cap // 3))
    vmem_limit = int(min(vmem_cap, vmem_budget + (8 << 20)))

    per_row_bytes = 2 * C * itemsize * (1 + nchan)        # double-buffered in+out
    br_cap = max(sub, (vmem_budget // per_row_bytes) // sub * sub)
    # Keep >= 2 grid steps whenever R allows, so v7x can shard the "parallel"
    # axis across its 2 TensorCores; otherwise take the biggest tile that fits.
    br_half = _round_up(pl.cdiv(R, 2), sub)
    br = max(sub, min(br_cap, br_half))
    grid_r = pl.cdiv(R, br)             # ragged last block handled by masking

    x_flat = x.reshape(N)
    pad = R * C - N
    if pad:
        # Minimal pad (< C elements) only when N isn't a multiple of the lane
        # width; row raggedness (R % br) is handled by Pallas boundary masking.
        x_flat = jnp.pad(x_flat, (0, pad))
    x2d = x_flat.reshape(R, C)

    out = pl.pallas_call(
        functools.partial(_pe_kernel, freq_num=freq_num, scale=scale),
        out_shape=jax.ShapeDtypeStruct((nchan, R, C), dtype),
        grid_spec=pltpu.PrefetchScalarGridSpec(
            num_scalar_prefetch=0,
            grid=(grid_r,),
            in_specs=[pl.BlockSpec((br, C), lambda i: (i, 0))],
            out_specs=pl.BlockSpec((nchan, br, C), lambda i: (0, i, 0)),
        ),
        compiler_params=pltpu.CompilerParams(
            dimension_semantics=("parallel",),
            vmem_limit_bytes=vmem_limit),
    )(x2d)

    out = out.reshape(nchan, R * C)
    if pad:
        out = out[:, :N]

    if channel_major:
        # Kernel-native layout: no interleave transpose, no extra HBM pass.
        return out.reshape((nchan,) + lead + (d,))

    # Torch cat order: result[..., k*d + j] = channel_k[..., j].
    # NOTE: this interleave re-reads/re-writes the full (1+2F)x output with a
    # tiny inner dim; use channel_major=True when the consumer can accept it.
    out = out.reshape(nchan, n, d)
    out = jnp.swapaxes(out, 0, 1)                  # (n, nchan, d)
    return out.reshape(lead + (d_out,))


def _reference(x, freq_num=1, scale=1.0):
    x_in = x
    out = x
    for i in range(freq_num):
        freq = 2 ** i
        out = jnp.concatenate(
            [out,
             jnp.sin(freq * math.pi * x_in / scale),
             jnp.cos(freq * math.pi * x_in / scale)],
            axis=-1)
    return out


if __name__ == "__main__":
    key = jax.random.PRNGKey(0)
    freq_num, scale = 2, 1.0
    nchan = 1 + 2 * freq_num

    # 1) dmtet-typical tiny call -> fused jnp fast path.
    x_small = jax.random.normal(key, (2, 64, 4), dtype=jnp.float32)
    out_small = jax.block_until_ready(positional_encoding(x_small, freq_num, scale))
    ref_small = _reference(x_small, freq_num, scale)
    assert out_small.shape == ref_small.shape == (2, 64, 4 * nchan)
    assert jnp.allclose(out_small, ref_small, atol=1e-5, rtol=1e-5)

    # 2) Larger call -> Pallas kernel path (N multiple of lane width, 2 grid steps).
    k_big = jax.random.fold_in(key, 1)
    x_big = jax.random.normal(k_big, (2, 2048, 4), dtype=jnp.float32)
    out_big = jax.block_until_ready(positional_encoding(x_big, freq_num, scale))
    ref_big = _reference(x_big, freq_num, scale)
    assert out_big.shape == ref_big.shape == (2, 2048, 4 * nchan)
    assert jnp.allclose(out_big, ref_big, atol=1e-5, rtol=1e-5)

    # 3) Ragged shape (d=3, N not a multiple of 512, ragged last block).
    k_rag = jax.random.fold_in(key, 2)
    x_rag = jax.random.normal(k_rag, (3, 700, 3), dtype=jnp.float32)
    out_rag = jax.block_until_ready(positional_encoding(x_rag, freq_num, scale))
    ref_rag = _reference(x_rag, freq_num, scale)
    assert out_rag.shape == ref_rag.shape == (3, 700, 3 * nchan)
    assert jnp.allclose(out_rag, ref_rag, atol=1e-5, rtol=1e-5)

    # 4) Channel-major fast layout (skips the interleave transpose).
    out_cm = jax.block_until_ready(
        positional_encoding(x_big, freq_num, scale, channel_major=True))
    ref_cm = jnp.moveaxis(ref_big.reshape(2, 2048, nchan, 4), 2, 0)
    assert out_cm.shape == (nchan, 2, 2048, 4)
    assert jnp.allclose(out_cm, ref_cm, atol=1e-5, rtol=1e-5)

    print("KERNEL_OK")
</pallas_src>

<mosaic_0001>
module attributes {stable_mosaic.version = 11 : i64} {
  func.func @_pe_kernel(%arg0: i32, %arg1: memref<16x512xf32, #tpu.memory_space<vmem>>, %arg2: memref<5x16x512xf32, #tpu.memory_space<vmem>>) attributes {dimension_semantics = [#tpu.dimension_semantics<parallel>], iteration_bounds = array<i64: 2>, scalar_prefetch = 0 : i64, scratch_operands = 0 : i64, tpu.core_type = #tpu.core_type<tc>, window_params = [{transform_indices = @transform_0, window_bounds = array<i64: 16, 512>}, {transform_indices = @transform_1, window_bounds = array<i64: 5, 16, 512>}]} {
    %c0 = arith.constant 0 : index
    %c0_0 = arith.constant 0 : index
    %0 = vector.load %arg1[%c0, %c0_0] : memref<16x512xf32, #tpu.memory_space<vmem>>, vector<16x512xf32>
    %c0_1 = arith.constant 0 : index
    %c0_2 = arith.constant 0 : index
    %c0_3 = arith.constant 0 : index
    %1 = vector.load %arg2[%c0_1, %c0_2, %c0_3] : memref<5x16x512xf32, #tpu.memory_space<vmem>>, vector<1x16x512xf32>
    %2 = vector.shape_cast %1 : vector<1x16x512xf32> to vector<16x512xf32>
    %3 = vector.shape_cast %0 : vector<16x512xf32> to vector<1x16x512xf32>
    tpu.vector_store %arg2[%c0_1, %c0_2, %c0_3], %3 {strides = array<i32>} : memref<5x16x512xf32, #tpu.memory_space<vmem>>, vector<1x16x512xf32>,
    %cst = arith.constant 3.14159274 : f32
    %4 = vector.broadcast %cst : f32 to vector<16x512xf32>
    %5 = arith.mulf %4, %0 : vector<16x512xf32>
    %6 = math.sin %5 : vector<16x512xf32>
    %7 = math.cos %5 : vector<16x512xf32>
    %c1 = arith.constant 1 : index
    %c0_4 = arith.constant 0 : index
    %c0_5 = arith.constant 0 : index
    %8 = vector.load %arg2[%c1, %c0_4, %c0_5] : memref<5x16x512xf32, #tpu.memory_space<vmem>>, vector<1x16x512xf32>
    %9 = vector.shape_cast %8 : vector<1x16x512xf32> to vector<16x512xf32>
    %10 = vector.shape_cast %6 : vector<16x512xf32> to vector<1x16x512xf32>
    tpu.vector_store %arg2[%c1, %c0_4, %c0_5], %10 {strides = array<i32>} : memref<5x16x512xf32, #tpu.memory_space<vmem>>, vector<1x16x512xf32>,
    %c2 = arith.constant 2 : index
    %c0_6 = arith.constant 0 : index
    %c0_7 = arith.constant 0 : index
    %11 = vector.load %arg2[%c2, %c0_6, %c0_7] : memref<5x16x512xf32, #tpu.memory_space<vmem>>, vector<1x16x512xf32>
    %12 = vector.shape_cast %11 : vector<1x16x512xf32> to vector<16x512xf32>
    %13 = vector.shape_cast %7 : vector<16x512xf32> to vector<1x16x512xf32>
    tpu.vector_store %arg2[%c2, %c0_6, %c0_7], %13 {strides = array<i32>} : memref<5x16x512xf32, #tpu.memory_space<vmem>>, vector<1x16x512xf32>,
    %cst_8 = arith.constant 2.000000e+00 : f32
    %14 = vector.broadcast %cst_8 : f32 to vector<16x512xf32>
    %15 = arith.mulf %14, %6 : vector<16x512xf32>
    %16 = arith.mulf %15, %7 : vector<16x512xf32>
    %17 = arith.mulf %6, %6 : vector<16x512xf32>
    %cst_9 = arith.constant 2.000000e+00 : f32
    %18 = vector.broadcast %cst_9 : f32 to vector<16x512xf32>
    %19 = arith.mulf %18, %17 : vector<16x512xf32>
    %cst_10 = arith.constant 1.000000e+00 : f32
    %20 = vector.broadcast %cst_10 : f32 to vector<16x512xf32>
    %21 = arith.subf %20, %19 : vector<16x512xf32>
    %c3 = arith.constant 3 : index
    %c0_11 = arith.constant 0 : index
    %c0_12 = arith.constant 0 : index
    %22 = vector.load %arg2[%c3, %c0_11, %c0_12] : memref<5x16x512xf32, #tpu.memory_space<vmem>>, vector<1x16x512xf32>
    %23 = vector.shape_cast %22 : vector<1x16x512xf32> to vector<16x512xf32>
    %24 = vector.shape_cast %16 : vector<16x512xf32> to vector<1x16x512xf32>
    tpu.vector_store %arg2[%c3, %c0_11, %c0_12], %24 {strides = array<i32>} : memref<5x16x512xf32, #tpu.memory_space<vmem>>, vector<1x16x512xf32>,
    %c4 = arith.constant 4 : index
    %c0_13 = arith.constant 0 : index
    %c0_14 = arith.constant 0 : index
    %25 = vector.load %arg2[%c4, %c0_13, %c0_14] : memref<5x16x512xf32, #tpu.memory_space<vmem>>, vector<1x16x512xf32>
    %26 = vector.shape_cast %25 : vector<1x16x512xf32> to vector<16x512xf32>
    %27 = vector.shape_cast %21 : vector<16x512xf32> to vector<1x16x512xf32>
    tpu.vector_store %arg2[%c4, %c0_13, %c0_14], %27 {strides = array<i32>} : memref<5x16x512xf32, #tpu.memory_space<vmem>>, vector<1x16x512xf32>,
    return
  }
  func.func @transform_0(%arg0: i32) -> (i32, i32) {
    %c0_i32 = arith.constant 0 : i32
    %c0_i32_0 = arith.constant 0 : i32
    return %arg0, %c0_i32 : i32, i32
  }
  func.func @transform_1(%arg0: i32) -> (i32, i32, i32) {
    %c0_i32 = arith.constant 0 : i32
    %c0_i32_0 = arith.constant 0 : i32
    %c0_i32_1 = arith.constant 0 : i32
    return %c0_i32, %arg0, %c0_i32_0 : i32, i32, i32
  }
}

</mosaic_0001>

<llo_original>
// kernel: tpu_custom_call.1
$region0: #{tpu_custom_call.1}
  #allocation0 [shape = 'u32[]', space=smem, size = 0x4, offset = 0x4, fixed_abs, tag = 'smem constant byte address 0x4 - core index']
  #allocation1 [shape = 'u32[144,128]{1,0:T(1,128)}', space=vmem, size = 0x12000, scoped, tag = 'internal scratch']
  #allocation6 [shape = 's32[]', space=sflag, size = 0x4, offset = 0, fixed_abs, tag = 'sflag constant byte address 0x0 - dummy sync flag']
  %s0 = inlined_call_operand.hbm [shape: f32[32,512], index: 0, kind: input, shape index: {}]
  %s1 = inlined_call_operand.hbm [shape: f32[5,32,512], index: 1, kind: output, shape index: {}]
  %s2 = sld [smem:[#allocation0]]
  $region41: #{tpu_custom_call.1} parent=0
    _
  %s4 = ssub.s32 1, %s2
  %s5 = scalar_select 0, %s4, %s2
  $region1: #{tpu_custom_call.1} parent=0
    #allocation2 [shape = 'u8[65536]{0}', space=vmem, size = 0x10000, scoped, tag = 'input window, operand 0']
    #allocation3 [shape = 's32[2]{0}', space=sflag, size = 0x8, scoped, tag = 'scoped memory for tpu_custom_call.1']
    #allocation4 [shape = 's32[2]{0}', space=sflag, size = 0x8, scoped, tag = 'scoped memory for tpu_custom_call.1']
    #allocation5 [shape = 'u8[327680]{0}', space=vmem, size = 0x50000, scoped, tag = 'output window, operand 0']
    %6 = vsyncpa [#allocation3], 0
    %s7 = scalar_lea.sflag [#allocation3], 1
    %8 = vsyncpa %s7, 0
    %9 = vsyncpa [#allocation4], 0
    %s10 = scalar_lea.sflag [#allocation4], 1
    %11 = vsyncpa %s10, 0
    loop: start=0, step=1, limit=4
    $region2: #{tpu_custom_call.1} parent=1 // loop_pre_header
      _
    $region3: #{tpu_custom_call.1} parent=1 // loop_header
      %s13 = sphi 0, %s17
      %p14 = scmp.ge.s32.totalorder %s13, 4
      %s23 = sphi 0, %s25
      %s26 = sphi 0, %s23
      %s27 = sphi 0, %s26
      %s43 = sphi 0, %s27
      %s49 = sphi 0, %s51
      %s52 = sphi 0, %s49
      %s53 = sphi 0, %s52
      %s69 = sphi 0, %s53
    $region4: #{tpu_custom_call.1} parent=1 // loop_header_branch
      %16 = sbr.rel (%p14) target = $region8
    $region5: #{tpu_custom_call.1} parent=1 // loop_body
      %s18 = ssub.s32 %s13, 1
      %s19 = ssub.s32 %s13, 2
      %s20 = sadd.s32 %s13, 1
      %s21 = ssub.s32 %s13, %s20
      %p22 = scmp.eq.s32.totalorder %s21, 0
      %s24 = sadd.s32 %s23, 1
      %s25 = scalar_select %p22, %s23, %s24
      %p28 = pneg %p22
      %p29 = scmp.eq.s32.totalorder %s13, 1
      %p30 = por %p28, %p29
      %p31 = scmp.ne.s32.totalorder %s23, %s26
      %p32 = scmp.eq.s32.totalorder %s13, 0
      %p33 = por %p31, %p32
      %p34 = scmp.ne.s32.totalorder %s23, %s26
      %p35 = scmp.eq.s32.totalorder %s18, 1
      %p36 = por %p34, %p35
      %p37 = scmp.ne.s32.totalorder %s26, %s27
      %p38 = scmp.eq.s32.totalorder %s18, 0
      %p39 = por %p37, %p38
      %p40 = scmp.ne.s32.totalorder %s26, %s27
      %p41 = scmp.eq.s32.totalorder %s19, 1
      %p42 = por %p40, %p41
      %p44 = scmp.ne.s32.totalorder %s27, %s43
      %p45 = scmp.eq.s32.totalorder %s19, 0
      %p46 = por %p44, %p45
      %s47 = ssub.s32 %s13, %s20
      %p48 = scmp.eq.s32.totalorder %s47, 0
      %s50 = sadd.s32 %s49, 1
      %s51 = scalar_select %p48, %s49, %s50
      %p54 = pneg %p48
      %p55 = scmp.eq.s32.totalorder %s13, 1
      %p56 = por %p54, %p55
      %p57 = scmp.ne.s32.totalorder %s49, %s52
      %p58 = scmp.eq.s32.totalorder %s13, 0
      %p59 = por %p57, %p58
      %p60 = scmp.ne.s32.totalorder %s49, %s52
      %p61 = scmp.eq.s32.totalorder %s18, 1
      %p62 = por %p60, %p61
      %p63 = scmp.ne.s32.totalorder %s52, %s53
      %p64 = scmp.eq.s32.totalorder %s18, 0
      %p65 = por %p63, %p64
      %p66 = scmp.ne.s32.totalorder %s52, %s53
      %p67 = scmp.eq.s32.totalorder %s19, 1
      %p68 = por %p66, %p67
      %p70 = scmp.ne.s32.totalorder %s53, %s69
      %p71 = scmp.eq.s32.totalorder %s19, 0
      %p72 = por %p70, %p71
      %p73 = scmp.le.s32.totalorder 1, %s13
      %p74 = scmp.lt.s32.totalorder %s13, 3
      %p75 = pnand %p73, %p74
      %p76 = pneg %p75
      // Predicated region
      $region9: #{tpu_custom_call.1} parent=5 // pred_check
        _
      $region10: #{tpu_custom_call.1} parent=5 // pred_check_branch
        %78 = sbr.rel (%p75) target = $region12
      $region11: #{tpu_custom_call.1} parent=5 // pred_region
        %s79 = ssub.s32 %s13, 1
      $region12: #{tpu_custom_call.1} parent=5 // pred_fallthru
        _
      %p80 = scmp.lt.s32.totalorder %s13, 2
      // Predicated region
      $region13: #{tpu_custom_call.1} parent=5 // pred_check
        %p81 = pneg %p80
      $region14: #{tpu_custom_call.1} parent=5 // pred_check_branch
        %83 = sbr.rel (%p81) target = $region16
      $region15: #{tpu_custom_call.1} parent=5 // pred_region
        // Predicated region
        $region17: #{tpu_custom_call.1} parent=15 // pred_check
          %p84 = pneg %p33
        $region18: #{tpu_custom_call.1} parent=15 // pred_check_branch
          %86 = sbr.rel (%p84) target = $region20
        $region19: #{tpu_custom_call.1} parent=15 // pred_region
          %s87 = sand.u32 %s23, 1
          %s88 = scalar_lea.sflag [#allocation3], %s87
          %s89 = sand.u32 %s23, 1
          %s90 = smul.addr %s89, 64
          %s91 = scalar_lea.vmem [#allocation2], %s90
          %s92 = smul.u32 2, %s13
          %s94 = ssub.s32 1024, 1024
          %95 = vsyncadd %s88, %s94
          %s96 = smul.addr %s92, 4
          %s97 = smul.addr %s96, 128
          %s98 = scalar_lea.hbm %s0, %s97
          %s99 = sshll.u32 %s91, 4
          %s100 = int_to_ptr.vmem [resolvable:$true] %s99
          %105 = dma.hbm_to_vmem [thread:$0]  %s98, 1024, %s100, %s88, 512, 512, 32
        $region20: #{tpu_custom_call.1} parent=15 // pred_fallthru
          _
      $region16: #{tpu_custom_call.1} parent=5 // pred_fallthru
        _
      %p106 = scmp.le.s32.totalorder 1, %s13
      %p107 = scmp.lt.s32.totalorder %s13, 3
      %p108 = pnand %p106, %p107
      %p109 = pneg %p108
      // Predicated region
      $region21: #{tpu_custom_call.1} parent=5 // pred_check
        _
      $region22: #{tpu_custom_call.1} parent=5 // pred_check_branch
        %111 = sbr.rel (%p108) target = $region24
      $region23: #{tpu_custom_call.1} parent=5 // pred_region
        %s112 = ssub.s32 %s13, 1
        %s113 = sand.u32 %s26, 1
        %s114 = scalar_lea.sflag [#allocation3], %s113
        %s115 = sand.u32 %s26, 1
        %s116 = smul.addr %s115, 64
        %s117 = scalar_lea.vmem [#allocation2], %s116
        // Predicated region
        $region25: #{tpu_custom_call.1} parent=23 // pred_check
          %p118 = pneg %p39
        $region26: #{tpu_custom_call.1} parent=23 // pred_check_branch
          %120 = sbr.rel (%p118) target = $region28
        $region27: #{tpu_custom_call.1} parent=23 // pred_region
          %121 = dma.done %s114, 1024
        $region28: #{tpu_custom_call.1} parent=23 // pred_fallthru
          _
        %s122 = sand.u32 %s26, 1
        %s123 = scalar_lea.sflag [#allocation3], %s122
        %s124 = sand.u32 %s26, 1
        %s125 = smul.addr %s124, 64
        %s126 = scalar_lea.vmem [#allocation2], %s125
        %p127 = pneg %p39
        %p128 = pneg %p36
        %p129 = pneg %p65
        %p130 = pneg %p62
        %s131 = sand.u32 %s52, 1
        %s132 = scalar_lea.sflag [#allocation4], %s131
        %s133 = sand.u32 %s52, 1
        %s134 = smul.addr %s133, 320
        %s135 = scalar_lea.vmem [#allocation5], %s134
        %s136 = smul.u32 2, %s18
        %s137 = smul.u32 2, %s18
        %v138 = vld [vmem:[%s117] sm:$0xff]
        %v139 = vld [vmem:[%s117 + $0x8] sm:$0xff]
        %v140 = vld [vmem:[%s117 + $0x10] sm:$0xff]
        %v141 = vld [vmem:[%s117 + $0x18] sm:$0xff]
        %v142 = vld [vmem:[%s117 + $0x20] sm:$0xff]
        %v143 = vld [vmem:[%s117 + $0x28] sm:$0xff]
        %v144 = vld [vmem:[%s117 + $0x30] sm:$0xff]
        %v145 = vld [vmem:[%s117 + $0x38] sm:$0xff]
        %146 = vst [vmem:[%s135] sm:$0xff] %v138
        %147 = vst [vmem:[%s135 + $0x8] sm:$0xff] %v139
        %148 = vst [vmem:[%s135 + $0x10] sm:$0xff] %v140
        %149 = vst [vmem:[%s135 + $0x18] sm:$0xff] %v141
        %150 = vst [vmem:[%s135 + $0x20] sm:$0xff] %v142
        %151 = vst [vmem:[%s135 + $0x28] sm:$0xff] %v143
        %152 = vst [vmem:[%s135 + $0x30] sm:$0xff] %v144
        %153 = vst [vmem:[%s135 + $0x38] sm:$0xff] %v145
        %v154 = vmul.f32 %v138, 3.1415927
        %v155 = vmul.f32 %v139, 3.1415927
        %v156 = vmul.f32 %v140, 3.1415927
        %v157 = vmul.f32 %v141, 3.1415927
        %v158 = vmul.f32 %v142, 3.1415927
        %v159 = vmul.f32 %v143, 3.1415927
        %v160 = vmul.f32 %v144, 3.1415927
        %v161 = vmul.f32 %v145, 3.1415927
        %v162 = vand.u32 2147483647, %v154
        %vm163 = vcmp.le.f32.partialorder %v162, 0.7853982
        %vm164 = vcmp.lt.s32.totalorder %v154, 0
        %v165 = vand.u32 %v154, 2139095040
        %v166 = vshrl.u32 %v165, 23
        %v167 = vsub.s32 %v166, 127
        %v168 = vand.u32 2147483647, %v154
        %v169 = vand.u32 %v168, 8388607
        %v170 = vor.u32 %v169, 8388608
        %v171 = vsub.s32 0, %v170
        %v172 = vadd.s32 %v167, 1
        %vm173 = vcmp.gt.s32.totalorder %v172, 0
        %v174 = vsel %vm173, %v172, 0
        %v175 = vshrl.u32 %v174, 5
        %v176 = vand.u32 %v174, 31
        %v177 = vsub.s32 32, %v176
        %v178 = vshrl.u32 683565275, %v177
        %v179 = vshll.u32 683565275, %v176
        %v180 = vshrl.u32 2475754826, %v177
        %v181 = vor.u32 %v179, %v180
        %v182 = vshll.u32 2475754826, %v176
        %v183 = vshrl.u32 2131351028, %v177
        %v184 = vor.u32 %v182, %v183
        %v185 = vshll.u32 2131351028, %v176
        %v186 = vshrl.u32 2102212464, %v177
        %v187 = vor.u32 %v185, %v186
        %v188 = vshll.u32 2102212464, %v176
        %v189 = vshrl.u32 920167782, %v177
        %v190 = vor.u32 %v188, %v189
        %v191 = vshll.u32 920167782, %v176
        %v192 = vshrl.u32 1326507024, %v177
        %v193 = vor.u32 %v191, %v192
        %vm194 = vcmp.lt.s32.totalorder %v175, 1
        %vm195 = vcmp.lt.s32.totalorder %v175, 2
        %vm196 = vcmp.lt.s32.totalorder %v175, 3
        %vm197 = vcmp.lt.s32.totalorder %v175, 4
        %v198 = vsel %vm194, %v178, %v181
        %v199 = vsel %vm197, %v187, 2102212464
        %v200 = vsel %vm196, %v184, %v199
        %v201 = vsel %vm195, %v198, %v200
        %v202 = vsel %vm194, %v181, %v184
        %v203 = vsel %vm197, %v190, 920167782
        %v204 = vsel %vm196, %v187, %v203
        %v205 = vsel %vm195, %v202, %v204
        %v206 = vsel %vm194, %v184, %v187
        %v207 = vsel %vm197, %v193, 1326507024
        %v208 = vsel %vm196, %v190, %v207
        %v209 = vsel %vm195, %v206, %v208
        %v210 = vshll.u32 %v170, 8
        %v211 = vmul.u32.u64.compose %v210, %v209
        %v212 = vextract.low.u32 %v211
        %v213 = vextract.high.u32 %v211
        %v214 = vmul.u32.u64.compose %v210, %v205
        %v215 = vextract.low.u32 %v214
        %v216 = vextract.high.u32 %v214
        %v217 = vmul.u32 %v210, %v201
        %v218 = vadd.s32 %v213, %v215
        %vm219 = vc.u32 %v213, %v215
        %v220 = vadd.s32 %v216, 1
        %v221 = vsel %vm219, %v220, %v216
        %v222 = vadd.s32 %v217, %v221
        %v223 = vadd.s32 %v222, 536870912
        %v224 = vshrl.u32 %v223, 30
        %v225 = vshll.u32 %v224, 30
        %v226 = vsub.s32 %v222, %v225
        %vm227 = vcmp.lt.s32.totalorder %v226, 0
        %v228 = vsub.s32 0, %v226
        %v229 = vsel %vm227, %v228, %v226
        %v230 = vclz %v229
        %v231 = vsub.s32 %v230, 2
        %vm232 = vcmp.gt.s32.totalorder 0, %v231
        %v233 = vsel %vm232, 0, %v231
        %v234 = vsub.s32 32, %v233
        %v235 = vshll.u32 %v226, %v233
        %v236 = vshrl.u32 %v218, %v234
        %v237 = vor.u32 %v235, %v236
        %v238 = vsub.s32 4294967266, %v233
        %v239 = vadd.s32 %v238, 127
        %v240 = vshll.u32 %v239, 23
        %v241 = vor.u32 4788187, %v240
        %v242 = vand.u32 2147483647, %v241
        %v244 = vcvt.s32.f32 %v237
        %v245 = vmul.f32 %v244, %v242
        %v246 = vxor.u32 %v245, 2147483648
        %v247 = vsel %vm164, %v246, %v245
        %v248 = vsub.s32 4, %v224
        %v249 = vsel %vm164, %v248, %v224
        %v250 = vsel %vm163, %v154, %v247
        %v251 = vsel %vm163, 0, %v249
        %v252 = vcosq.f32.pop %v250
        %v253 = vsinq.f32.pop %v250
        %vm254 = vweird.f32 %v154
        %v255 = vadd.s32 %v251, 3
        %v256 = vand.u32 %v255, 3
        %vm257 = vcmp.lt.s32.totalorder %v256, 2
        %vm258 = vcmp.eq.s32.totalorder %v256, 0
        %v259 = vxor.u32 %v253, 2147483648
        %v260 = vsel %vm258, %v252, %v259
        %vm261 = vcmp.eq.s32.totalorder %v256, 2
        %v262 = vxor.u32 %v252, 2147483648
        %v263 = vsel %vm261, %v262, %v253
        %v264 = vsel %vm257, %v260, %v263
        %v265 = vsel %vm254, nan, %v264
        %v266 = vand.u32 2147483647, %v155
        %vm267 = vcmp.le.f32.partialorder %v266, 0.7853982
        %vm268 = vcmp.lt.s32.totalorder %v155, 0
        %v269 = vand.u32 %v155, 2139095040
        %v270 = vshrl.u32 %v269, 23
        %v271 = vsub.s32 %v270, 127
        %v272 = vand.u32 2147483647, %v155
        %v273 = vand.u32 %v272, 8388607
        %v274 = vor.u32 %v273, 8388608
        %v275 = vsub.s32 0, %v274
        %v276 = vadd.s32 %v271, 1
        %vm277 = vcmp.gt.s32.totalorder %v276, 0
        %v278 = vsel %vm277, %v276, 0
        %v279 = vshrl.u32 %v278, 5
        %v280 = vand.u32 %v278, 31
        %v281 = vsub.s32 32, %v280
        %v282 = vshrl.u32 683565275, %v281
        %v283 = vshll.u32 683565275, %v280
        %v284 = vshrl.u32 2475754826, %v281
        %v285 = vor.u32 %v283, %v284
        %v286 = vshll.u32 2475754826, %v280
        %v287 = vshrl.u32 2131351028, %v281
        %v288 = vor.u32 %v286, %v287
        %v289 = vshll.u32 2131351028, %v280
        %v290 = vshrl.u32 2102212464, %v281
        %v291 = vor.u32 %v289, %v290
        %v292 = vshll.u32 2102212464, %v280
        %v293 = vshrl.u32 920167782, %v281
        %v294 = vor.u32 %v292, %v293
        %v295 = vshll.u32 920167782, %v280
        %v296 = vshrl.u32 1326507024, %v281
        %v297 = vor.u32 %v295, %v296
        %vm298 = vcmp.lt.s32.totalorder %v279, 1
        %vm299 = vcmp.lt.s32.totalorder %v279, 2
        %vm300 = vcmp.lt.s32.totalorder %v279, 3
        %vm301 = vcmp.lt.s32.totalorder %v279, 4
        %v302 = vsel %vm298, %v282, %v285
        %v303 = vsel %vm301, %v291, 2102212464
        %v304 = vsel %vm300, %v288, %v303
        %v305 = vsel %vm299, %v302, %v304
        %v306 = vsel %vm298, %v285, %v288
        %v307 = vsel %vm301, %v294, 920167782
        %v308 = vsel %vm300, %v291, %v307
        %v309 = vsel %vm299, %v306, %v308
        %v310 = vsel %vm298, %v288, %v291
        %v311 = vsel %vm301, %v297, 1326507024
        %v312 = vsel %vm300, %v294, %v311
        %v313 = vsel %vm299, %v310, %v312
        %v314 = vshll.u32 %v274, 8
        %v315 = vmul.u32.u64.compose %v314, %v313
        %v316 = vextract.low.u32 %v315
        %v317 = vextract.high.u32 %v315
        %v318 = vmul.u32.u64.compose %v314, %v309
        %v319 = vextract.low.u32 %v318
        %v320 = vextract.high.u32 %v318
        %v321 = vmul.u32 %v314, %v305
        %v322 = vadd.s32 %v317, %v319
        %vm323 = vc.u32 %v317, %v319
        %v324 = vadd.s32 %v320, 1
        %v325 = vsel %vm323, %v324, %v320
        %v326 = vadd.s32 %v321, %v325
        %v327 = vadd.s32 %v326, 536870912
        %v328 = vshrl.u32 %v327, 30
        %v329 = vshll.u32 %v328, 30
        %v330 = vsub.s32 %v326, %v329
        %vm331 = vcmp.lt.s32.totalorder %v330, 0
        %v332 = vsub.s32 0, %v330
        %v333 = vsel %vm331, %v332, %v330
        %v334 = vclz %v333
        %v335 = vsub.s32 %v334, 2
        %vm336 = vcmp.gt.s32.totalorder 0, %v335
        %v337 = vsel %vm336, 0, %v335
        %v338 = vsub.s32 32, %v337
        %v339 = vshll.u32 %v330, %v337
        %v340 = vshrl.u32 %v322, %v338
        %v341 = vor.u32 %v339, %v340
        %v342 = vsub.s32 4294967266, %v337
        %v343 = vadd.s32 %v342, 127
        %v344 = vshll.u32 %v343, 23
        %v345 = vor.u32 4788187, %v344
        %v346 = vand.u32 2147483647, %v345
        %v348 = vcvt.s32.f32 %v341
        %v349 = vmul.f32 %v348, %v346
        %v350 = vxor.u32 %v349, 2147483648
        %v351 = vsel %vm268, %v350, %v349
        %v352 = vsub.s32 4, %v328
        %v353 = vsel %vm268, %v352, %v328
        %v354 = vsel %vm267, %v155, %v351
        %v355 = vsel %vm267, 0, %v353
        %v356 = vcosq.f32.pop %v354
        %v357 = vsinq.f32.pop %v354
        %vm358 = vweird.f32 %v155
        %v359 = vadd.s32 %v355, 3
        %v360 = vand.u32 %v359, 3
        %vm361 = vcmp.lt.s32.totalorder %v360, 2
        %vm362 = vcmp.eq.s32.totalorder %v360, 0
        %v363 = vxor.u32 %v357, 2147483648
        %v364 = vsel %vm362, %v356, %v363
        %vm365 = vcmp.eq.s32.totalorder %v360, 2
        %v366 = vxor.u32 %v356, 2147483648
        %v367 = vsel %vm365, %v366, %v357
        %v368 = vsel %vm361, %v364, %v367
        %v369 = vsel %vm358, nan, %v368
        %v370 = vand.u32 2147483647, %v156
        %vm371 = vcmp.le.f32.partialorder %v370, 0.7853982
        %vm372 = vcmp.lt.s32.totalorder %v156, 0
        %v373 = vand.u32 %v156, 2139095040
        %v374 = vshrl.u32 %v373, 23
        %v375 = vsub.s32 %v374, 127
        %v376 = vand.u32 2147483647, %v156
        %v377 = vand.u32 %v376, 8388607
        %v378 = vor.u32 %v377, 8388608
        %v379 = vsub.s32 0, %v378
        %v380 = vadd.s32 %v375, 1
        %vm381 = vcmp.gt.s32.totalorder %v380, 0
        %v382 = vsel %vm381, %v380, 0
        %v383 = vshrl.u32 %v382, 5
        %v384 = vand.u32 %v382, 31
        %v385 = vsub.s32 32, %v384
        %v386 = vshrl.u32 683565275, %v385
        %v387 = vshll.u32 683565275, %v384
        %v388 = vshrl.u32 2475754826, %v385
        %v389 = vor.u32 %v387, %v388
        %v390 = vshll.u32 2475754826, %v384
        %v391 = vshrl.u32 2131351028, %v385
        %v392 = vor.u32 %v390, %v391
        %v393 = vshll.u32 2131351028, %v384
        %v394 = vshrl.u32 2102212464, %v385
        %v395 = vor.u32 %v393, %v394
        %v396 = vshll.u32 2102212464, %v384
        %v397 = vshrl.u32 920167782, %v385
        %v398 = vor.u32 %v396, %v397
        %v399 = vshll.u32 920167782, %v384
        %v400 = vshrl.u32 1326507024, %v385
        %v401 = vor.u32 %v399, %v400
        %vm402 = vcmp.lt.s32.totalorder %v383, 1
        %vm403 = vcmp.lt.s32.totalorder %v383, 2
        %vm404 = vcmp.lt.s32.totalorder %v383, 3
        %vm405 = vcmp.lt.s32.totalorder %v383, 4
        %v406 = vsel %vm402, %v386, %v389
        %v407 = vsel %vm405, %v395, 2102212464
        %v408 = vsel %vm404, %v392, %v407
        %v409 = vsel %vm403, %v406, %v408
        %v410 = vsel %vm402, %v389, %v392
        %v411 = vsel %vm405, %v398, 920167782
        %v412 = vsel %vm404, %v395, %v411
        %v413 = vsel %vm403, %v410, %v412
        %v414 = vsel %vm402, %v392, %v395
        %v415 = vsel %vm405, %v401, 1326507024
        %v416 = vsel %vm404, %v398, %v415
        %v417 = vsel %vm403, %v414, %v416
        %v418 = vshll.u32 %v378, 8
        %v419 = vmul.u32.u64.compose %v418, %v417
        %v420 = vextract.low.u32 %v419
        %v421 = vextract.high.u32 %v419
        %v422 = vmul.u32.u64.compose %v418, %v413
        %v423 = vextract.low.u32 %v422
        %v424 = vextract.high.u32 %v422
        %v425 = vmul.u32 %v418, %v409
        %v426 = vadd.s32 %v421, %v423
        %vm427 = vc.u32 %v421, %v423
        %v428 = vadd.s32 %v424, 1
        %v429 = vsel %vm427, %v428, %v424
        %v430 = vadd.s32 %v425, %v429
        %v431 = vadd.s32 %v430, 536870912
        %v432 = vshrl.u32 %v431, 30
        %v433 = vshll.u32 %v432, 30
        %v434 = vsub.s32 %v430, %v433
        %vm435 = vcmp.lt.s32.totalorder %v434, 0
        %v436 = vsub.s32 0, %v434
        %v437 = vsel %vm435, %v436, %v434
        %v438 = vclz %v437
        %v439 = vsub.s32 %v438, 2
        %vm440 = vcmp.gt.s32.totalorder 0, %v439
        %v441 = vsel %vm440, 0, %v439
        %v442 = vsub.s32 32, %v441
        %v443 = vshll.u32 %v434, %v441
        %v444 = vshrl.u32 %v426, %v442
        %v445 = vor.u32 %v443, %v444
        %v446 = vsub.s32 4294967266, %v441
        %v447 = vadd.s32 %v446, 127
        %v448 = vshll.u32 %v447, 23
        %v449 = vor.u32 4788187, %v448
        %v450 = vand.u32 2147483647, %v449
        %v452 = vcvt.s32.f32 %v445
        %v453 = vmul.f32 %v452, %v450
        %v454 = vxor.u32 %v453, 2147483648
        %v455 = vsel %vm372, %v454, %v453
        %v456 = vsub.s32 4, %v432
        %v457 = vsel %vm372, %v456, %v432
        %v458 = vsel %vm371, %v156, %v455
        %v459 = vsel %vm371, 0, %v457
        %v460 = vcosq.f32.pop %v458
        %v461 = vsinq.f32.pop %v458
        %vm462 = vweird.f32 %v156
        %v463 = vadd.s32 %v459, 3
        %v464 = vand.u32 %v463, 3
        %vm465 = vcmp.lt.s32.totalorder %v464, 2
        %vm466 = vcmp.eq.s32.totalorder %v464, 0
        %v467 = vxor.u32 %v461, 2147483648
        %v468 = vsel %vm466, %v460, %v467
        %vm469 = vcmp.eq.s32.totalorder %v464, 2
        %v470 = vxor.u32 %v460, 2147483648
        %v471 = vsel %vm469, %v470, %v461
        %v472 = vsel %vm465, %v468, %v471
        %v473 = vsel %vm462, nan, %v472
        %v474 = vand.u32 2147483647, %v157
        %vm475 = vcmp.le.f32.partialorder %v474, 0.7853982
        %vm476 = vcmp.lt.s32.totalorder %v157, 0
        %v477 = vand.u32 %v157, 2139095040
        %v478 = vshrl.u32 %v477, 23
        %v479 = vsub.s32 %v478, 127
        %v480 = vand.u32 2147483647, %v157
        %v481 = vand.u32 %v480, 8388607
        %v482 = vor.u32 %v481, 8388608
        %v483 = vsub.s32 0, %v482
        %v484 = vadd.s32 %v479, 1
        %vm485 = vcmp.gt.s32.totalorder %v484, 0
        %v486 = vsel %vm485, %v484, 0
        %v487 = vshrl.u32 %v486, 5
        %v488 = vand.u32 %v486, 31
        %v489 = vsub.s32 32, %v488
        %v490 = vshrl.u32 683565275, %v489
        %v491 = vshll.u32 683565275, %v488
        %v492 = vshrl.u32 2475754826, %v489
        %v493 = vor.u32 %v491, %v492
        %v494 = vshll.u32 2475754826, %v488
        %v495 = vshrl.u32 2131351028, %v489
        %v496 = vor.u32 %v494, %v495
        %v497 = vshll.u32 2131351028, %v488
        %v498 = vshrl.u32 2102212464, %v489
        %v499 = vor.u32 %v497, %v498
        %v500 = vshll.u32 2102212464, %v488
        %v501 = vshrl.u32 920167782, %v489
        %v502 = vor.u32 %v500, %v501
        %v503 = vshll.u32 920167782, %v488
        %v504 = vshrl.u32 1326507024, %v489
        %v505 = vor.u32 %v503, %v504
        %vm506 = vcmp.lt.s32.totalorder %v487, 1
        %vm507 = vcmp.lt.s32.totalorder %v487, 2
        %vm508 = vcmp.lt.s32.totalorder %v487, 3
        %vm509 = vcmp.lt.s32.totalorder %v487, 4
        %v510 = vsel %vm506, %v490, %v493
        %v511 = vsel %vm509, %v499, 2102212464
        %v512 = vsel %vm508, %v496, %v511
        %v513 = vsel %vm507, %v510, %v512
        %v514 = vsel %vm506, %v493, %v496
        %v515 = vsel %vm509, %v502, 920167782
        %v516 = vsel %vm508, %v499, %v515
        %v517 = vsel %vm507, %v514, %v516
        %v518 = vsel %vm506, %v496, %v499
        %v519 = vsel %vm509, %v505, 1326507024
        %v520 = vsel %vm508, %v502, %v519
        %v521 = vsel %vm507, %v518, %v520
        %v522 = vshll.u32 %v482, 8
        %v523 = vmul.u32.u64.compose %v522, %v521
        %v524 = vextract.low.u32 %v523
        %v525 = vextract.high.u32 %v523
        %v526 = vmul.u32.u64.compose %v522, %v517
        %v527 = vextract.low.u32 %v526
        %v528 = vextract.high.u32 %v526
        %v529 = vmul.u32 %v522, %v513
        %v530 = vadd.s32 %v525, %v527
        %vm531 = vc.u32 %v525, %v527
        %v532 = vadd.s32 %v528, 1
        %v533 = vsel %vm531, %v532, %v528
        %v534 = vadd.s32 %v529, %v533
        %v535 = vadd.s32 %v534, 536870912
        %v536 = vshrl.u32 %v535, 30
        %v537 = vshll.u32 %v536, 30
        %v538 = vsub.s32 %v534, %v537
        %vm539 = vcmp.lt.s32.totalorder %v538, 0
        %v540 = vsub.s32 0, %v538
        %v541 = vsel %vm539, %v540, %v538
        %v542 = vclz %v541
        %v543 = vsub.s32 %v542, 2
        %vm544 = vcmp.gt.s32.totalorder 0, %v543
        %v545 = vsel %vm544, 0, %v543
        %v546 = vsub.s32 32, %v545
        %v547 = vshll.u32 %v538, %v545
        %v548 = vshrl.u32 %v530, %v546
        %v549 = vor.u32 %v547, %v548
        %v550 = vsub.s32 4294967266, %v545
        %v551 = vadd.s32 %v550, 127
        %v552 = vshll.u32 %v551, 23
        %v553 = vor.u32 4788187, %v552
        %v554 = vand.u32 2147483647, %v553
        %v556 = vcvt.s32.f32 %v549
        %v557 = vmul.f32 %v556, %v554
        %v558 = vxor.u32 %v557, 2147483648
        %v559 = vsel %vm476, %v558, %v557
        %v560 = vsub.s32 4, %v536
        %v561 = vsel %vm476, %v560, %v536
        %v562 = vsel %vm475, %v157, %v559
        %v563 = vsel %vm475, 0, %v561
        %v564 = vcosq.f32.pop %v562
        %v565 = vsinq.f32.pop %v562
        %vm566 = vweird.f32 %v157
        %v567 = vadd.s32 %v563, 3
        %v568 = vand.u32 %v567, 3
        %vm569 = vcmp.lt.s32.totalorder %v568, 2
        %vm570 = vcmp.eq.s32.totalorder %v568, 0
        %v571 = vxor.u32 %v565, 2147483648
        %v572 = vsel %vm570, %v564, %v571
        %vm573 = vcmp.eq.s32.totalorder %v568, 2
        %v574 = vxor.u32 %v564, 2147483648
        %v575 = vsel %vm573, %v574, %v565
        %v576 = vsel %vm569, %v572, %v575
        %v577 = vsel %vm566, nan, %v576
        %v578 = vand.u32 2147483647, %v158
        %vm579 = vcmp.le.f32.partialorder %v578, 0.7853982
        %vm580 = vcmp.lt.s32.totalorder %v158, 0
        %v581 = vand.u32 %v158, 2139095040
        %v582 = vshrl.u32 %v581, 23
        %v583 = vsub.s32 %v582, 127
        %v584 = vand.u32 2147483647, %v158
        %v585 = vand.u32 %v584, 8388607
        %v586 = vor.u32 %v585, 8388608
        %v587 = vsub.s32 0, %v586
        %v588 = vadd.s32 %v583, 1
        %vm589 = vcmp.gt.s32.totalorder %v588, 0
        %v590 = vsel %vm589, %v588, 0
        %v591 = vshrl.u32 %v590, 5
        %v592 = vand.u32 %v590, 31
        %v593 = vsub.s32 32, %v592
        %v594 = vshrl.u32 683565275, %v593
        %v595 = vshll.u32 683565275, %v592
        %v596 = vshrl.u32 2475754826, %v593
        %v597 = vor.u32 %v595, %v596
        %v598 = vshll.u32 2475754826, %v592
        %v599 = vshrl.u32 2131351028, %v593
        %v600 = vor.u32 %v598, %v599
        %v601 = vshll.u32 2131351028, %v592
        %v602 = vshrl.u32 2102212464, %v593
        %v603 = vor.u32 %v601, %v602
        %v604 = vshll.u32 2102212464, %v592
        %v605 = vshrl.u32 920167782, %v593
        %v606 = vor.u32 %v604, %v605
        %v607 = vshll.u32 920167782, %v592
        %v608 = vshrl.u32 1326507024, %v593
        %v609 = vor.u32 %v607, %v608
        %vm610 = vcmp.lt.s32.totalorder %v591, 1
        %vm611 = vcmp.lt.s32.totalorder %v591, 2
        %vm612 = vcmp.lt.s32.totalorder %v591, 3
        %vm613 = vcmp.lt.s32.totalorder %v591, 4
        %v614 = vsel %vm610, %v594, %v597
        %v615 = vsel %vm613, %v603, 2102212464
        %v616 = vsel %vm612, %v600, %v615
        %v617 = vsel %vm611, %v614, %v616
        %v618 = vsel %vm610, %v597, %v600
        %v619 = vsel %vm613, %v606, 920167782
        %v620 = vsel %vm612, %v603, %v619
        %v621 = vsel %vm611, %v618, %v620
        %v622 = vsel %vm610, %v600, %v603
        %v623 = vsel %vm613, %v609, 1326507024
        %v624 = vsel %vm612, %v606, %v623
        %v625 = vsel %vm611, %v622, %v624
        %v626 = vshll.u32 %v586, 8
        %v627 = vmul.u32.u64.compose %v626, %v625
        %v628 = vextract.low.u32 %v627
        %v629 = vextract.high.u32 %v627
        %v630 = vmul.u32.u64.compose %v626, %v621
        %v631 = vextract.low.u32 %v630
        %v632 = vextract.high.u32 %v630
        %v633 = vmul.u32 %v626, %v617
        %v634 = vadd.s32 %v629, %v631
        %vm635 = vc.u32 %v629, %v631
        %v636 = vadd.s32 %v632, 1
        %v637 = vsel %vm635, %v636, %v632
        %v638 = vadd.s32 %v633, %v637
        %v639 = vadd.s32 %v638, 536870912
        %v640 = vshrl.u32 %v639, 30
        %v641 = vshll.u32 %v640, 30
        %v642 = vsub.s32 %v638, %v641
        %vm643 = vcmp.lt.s32.totalorder %v642, 0
        %v644 = vsub.s32 0, %v642
        %v645 = vsel %vm643, %v644, %v642
        %v646 = vclz %v645
        %v647 = vsub.s32 %v646, 2
        %vm648 = vcmp.gt.s32.totalorder 0, %v647
        %v649 = vsel %vm648, 0, %v647
        %v650 = vsub.s32 32, %v649
        %v651 = vshll.u32 %v642, %v649
        %v652 = vshrl.u32 %v634, %v650
        %v653 = vor.u32 %v651, %v652
        %v654 = vsub.s32 4294967266, %v649
        %v655 = vadd.s32 %v654, 127
        %v656 = vshll.u32 %v655, 23
        %v657 = vor.u32 4788187, %v656
        %v658 = vand.u32 2147483647, %v657
        %v660 = vcvt.s32.f32 %v653
        %v661 = vmul.f32 %v660, %v658
        %v662 = vxor.u32 %v661, 2147483648
        %v663 = vsel %vm580, %v662, %v661
        %v664 = vsub.s32 4, %v640
        %v665 = vsel %vm580, %v664, %v640
        %v666 = vsel %vm579, %v158, %v663
        %v667 = vsel %vm579, 0, %v665
        %v668 = vcosq.f32.pop %v666
        %v669 = vsinq.f32.pop %v666
        %vm670 = vweird.f32 %v158
        %v671 = vadd.s32 %v667, 3
        %v672 = vand.u32 %v671, 3
        %vm673 = vcmp.lt.s32.totalorder %v672, 2
        %vm674 = vcmp.eq.s32.totalorder %v672, 0
        %v675 = vxor.u32 %v669, 2147483648
        %v676 = vsel %vm674, %v668, %v675
        %vm677 = vcmp.eq.s32.totalorder %v672, 2
        %v678 = vxor.u32 %v668, 2147483648
        %v679 = vsel %vm677, %v678, %v669
        %v680 = vsel %vm673, %v676, %v679
        %v681 = vsel %vm670, nan, %v680
        %v682 = vand.u32 2147483647, %v159
        %vm683 = vcmp.le.f32.partialorder %v682, 0.7853982
        %vm684 = vcmp.lt.s32.totalorder %v159, 0
        %v685 = vand.u32 %v159, 2139095040
        %v686 = vshrl.u32 %v685, 23
        %v687 = vsub.s32 %v686, 127
        %v688 = vand.u32 2147483647, %v159
        %v689 = vand.u32 %v688, 8388607
        %v690 = vor.u32 %v689, 8388608
        %v691 = vsub.s32 0, %v690
        %v692 = vadd.s32 %v687, 1
        %vm693 = vcmp.gt.s32.totalorder %v692, 0
        %v694 = vsel %vm693, %v692, 0
        %v695 = vshrl.u32 %v694, 5
        %v696 = vand.u32 %v694, 31
        %v697 = vsub.s32 32, %v696
        %v698 = vshrl.u32 683565275, %v697
        %v699 = vshll.u32 683565275, %v696
        %v700 = vshrl.u32 2475754826, %v697
        %v701 = vor.u32 %v699, %v700
        %v702 = vshll.u32 2475754826, %v696
        %v703 = vshrl.u32 2131351028, %v697
        %v704 = vor.u32 %v702, %v703
        %v705 = vshll.u32 2131351028, %v696
        %v706 = vshrl.u32 2102212464, %v697
        %v707 = vor.u32 %v705, %v706
        %v708 = vshll.u32 2102212464, %v696
        %v709 = vshrl.u32 920167782, %v697
        %v710 = vor.u32 %v708, %v709
        %v711 = vshll.u32 920167782, %v696
        %v712 = vshrl.u32 1326507024, %v697
        %v713 = vor.u32 %v711, %v712
        %vm714 = vcmp.lt.s32.totalorder %v695, 1
        %vm715 = vcmp.lt.s32.totalorder %v695, 2
        %vm716 = vcmp.lt.s32.totalorder %v695, 3
        %vm717 = vcmp.lt.s32.totalorder %v695, 4
        %v718 = vsel %vm714, %v698, %v701
        %v719 = vsel %vm717, %v707, 2102212464
        %v720 = vsel %vm716, %v704, %v719
        %v721 = vsel %vm715, %v718, %v720
        %v722 = vsel %vm714, %v701, %v704
        %v723 = vsel %vm717, %v710, 920167782
        %v724 = vsel %vm716, %v707, %v723
        %v725 = vsel %vm715, %v722, %v724
        %v726 = vsel %vm714, %v704, %v707
        %v727 = vsel %vm717, %v713, 1326507024
        %v728 = vsel %vm716, %v710, %v727
        %v729 = vsel %vm715, %v726, %v728
        %v730 = vshll.u32 %v690, 8
        %v731 = vmul.u32.u64.compose %v730, %v729
        %v732 = vextract.low.u32 %v731
        %v733 = vextract.high.u32 %v731
        %v734 = vmul.u32.u64.compose %v730, %v725
        %v735 = vextract.low.u32 %v734
        %v736 = vextract.high.u32 %v734
        %v737 = vmul.u32 %v730, %v721
        %v738 = vadd.s32 %v733, %v735
        %vm739 = vc.u32 %v733, %v735
        %v740 = vadd.s32 %v736, 1
        %v741 = vsel %vm739, %v740, %v736
        %v742 = vadd.s32 %v737, %v741
        %v743 = vadd.s32 %v742, 536870912
        %v744 = vshrl.u32 %v743, 30
        %v745 = vshll.u32 %v744, 30
        %v746 = vsub.s32 %v742, %v745
        %vm747 = vcmp.lt.s32.totalorder %v746, 0
        %v748 = vsub.s32 0, %v746
        %v749 = vsel %vm747, %v748, %v746
        %v750 = vclz %v749
        %v751 = vsub.s32 %v750, 2
        %vm752 = vcmp.gt.s32.totalorder 0, %v751
        %v753 = vsel %vm752, 0, %v751
        %v754 = vsub.s32 32, %v753
        %v755 = vshll.u32 %v746, %v753
        %v756 = vshrl.u32 %v738, %v754
        %v757 = vor.u32 %v755, %v756
        %v758 = vsub.s32 4294967266, %v753
        %v759 = vadd.s32 %v758, 127
        %v760 = vshll.u32 %v759, 23
        %v761 = vor.u32 4788187, %v760
        %v762 = vand.u32 2147483647, %v761
        %v764 = vcvt.s32.f32 %v757
        %v765 = vmul.f32 %v764, %v762
        %v766 = vxor.u32 %v765, 2147483648
        %v767 = vsel %vm684, %v766, %v765
        %v768 = vsub.s32 4, %v744
        %v769 = vsel %vm684, %v768, %v744
        %v770 = vsel %vm683, %v159, %v767
        %v771 = vsel %vm683, 0, %v769
        %v772 = vcosq.f32.pop %v770
        %v773 = vsinq.f32.pop %v770
        %vm774 = vweird.f32 %v159
        %v775 = vadd.s32 %v771, 3
        %v776 = vand.u32 %v775, 3
        %vm777 = vcmp.lt.s32.totalorder %v776, 2
        %vm778 = vcmp.eq.s32.totalorder %v776, 0
        %v779 = vxor.u32 %v773, 2147483648
        %v780 = vsel %vm778, %v772, %v779
        %vm781 = vcmp.eq.s32.totalorder %v776, 2
        %v782 = vxor.u32 %v772, 2147483648
        %v783 = vsel %vm781, %v782, %v773
        %v784 = vsel %vm777, %v780, %v783
        %v785 = vsel %vm774, nan, %v784
        %v786 = vand.u32 2147483647, %v160
        %vm787 = vcmp.le.f32.partialorder %v786, 0.7853982
        %vm788 = vcmp.lt.s32.totalorder %v160, 0
        %v789 = vand.u32 %v160, 2139095040
        %v790 = vshrl.u32 %v789, 23
        %v791 = vsub.s32 %v790, 127
        %v792 = vand.u32 2147483647, %v160
        %v793 = vand.u32 %v792, 8388607
        %v794 = vor.u32 %v793, 8388608
        %v795 = vsub.s32 0, %v794
        %v796 = vadd.s32 %v791, 1
        %vm797 = vcmp.gt.s32.totalorder %v796, 0
        %v798 = vsel %vm797, %v796, 0
        %v799 = vshrl.u32 %v798, 5
        %v800 = vand.u32 %v798, 31
        %v801 = vsub.s32 32, %v800
        %v802 = vshrl.u32 683565275, %v801
        %v803 = vshll.u32 683565275, %v800
        %v804 = vshrl.u32 2475754826, %v801
        %v805 = vor.u32 %v803, %v804
        %v806 = vshll.u32 2475754826, %v800
        %v807 = vshrl.u32 2131351028, %v801
        %v808 = vor.u32 %v806, %v807
        %v809 = vshll.u32 2131351028, %v800
        %v810 = vshrl.u32 2102212464, %v801
        %v811 = vor.u32 %v809, %v810
        %v812 = vshll.u32 2102212464, %v800
        %v813 = vshrl.u32 920167782, %v801
        %v814 = vor.u32 %v812, %v813
        %v815 = vshll.u32 920167782, %v800
        %v816 = vshrl.u32 1326507024, %v801
        %v817 = vor.u32 %v815, %v816
        %vm818 = vcmp.lt.s32.totalorder %v799, 1
        %vm819 = vcmp.lt.s32.totalorder %v799, 2
        %vm820 = vcmp.lt.s32.totalorder %v799, 3
        %vm821 = vcmp.lt.s32.totalorder %v799, 4
        %v822 = vsel %vm818, %v802, %v805
        %v823 = vsel %vm821, %v811, 2102212464
        %v824 = vsel %vm820, %v808, %v823
        %v825 = vsel %vm819, %v822, %v824
        %v826 = vsel %vm818, %v805, %v808
        %v827 = vsel %vm821, %v814, 920167782
        %v828 = vsel %vm820, %v811, %v827
        %v829 = vsel %vm819, %v826, %v828
        %v830 = vsel %vm818, %v808, %v811
        %v831 = vsel %vm821, %v817, 1326507024
        %v832 = vsel %vm820, %v814, %v831
        %v833 = vsel %vm819, %v830, %v832
        %v834 = vshll.u32 %v794, 8
        %v835 = vmul.u32.u64.compose %v834, %v833
        %v836 = vextract.low.u32 %v835
        %v837 = vextract.high.u32 %v835
        %v838 = vmul.u32.u64.compose %v834, %v829
        %v839 = vextract.low.u32 %v838
        %v840 = vextract.high.u32 %v838
        %v841 = vmul.u32 %v834, %v825
        %v842 = vadd.s32 %v837, %v839
        %vm843 = vc.u32 %v837, %v839
        %v844 = vadd.s32 %v840, 1
        %v845 = vsel %vm843, %v844, %v840
        %v846 = vadd.s32 %v841, %v845
        %v847 = vadd.s32 %v846, 536870912
        %v848 = vshrl.u32 %v847, 30
        %v849 = vshll.u32 %v848, 30
        %v850 = vsub.s32 %v846, %v849
        %vm851 = vcmp.lt.s32.totalorder %v850, 0
        %v852 = vsub.s32 0, %v850
        %v853 = vsel %vm851, %v852, %v850
        %v854 = vclz %v853
        %v855 = vsub.s32 %v854, 2
        %vm856 = vcmp.gt.s32.totalorder 0, %v855
        %v857 = vsel %vm856, 0, %v855
        %v858 = vsub.s32 32, %v857
        %v859 = vshll.u32 %v850, %v857
        %v860 = vshrl.u32 %v842, %v858
        %v861 = vor.u32 %v859, %v860
        %v862 = vsub.s32 4294967266, %v857
        %v863 = vadd.s32 %v862, 127
        %v864 = vshll.u32 %v863, 23
        %v865 = vor.u32 4788187, %v864
        %v866 = vand.u32 2147483647, %v865
        %v868 = vcvt.s32.f32 %v861
        %v869 = vmul.f32 %v868, %v866
        %v870 = vxor.u32 %v869, 2147483648
        %v871 = vsel %vm788, %v870, %v869
        %v872 = vsub.s32 4, %v848
        %v873 = vsel %vm788, %v872, %v848
        %v874 = vsel %vm787, %v160, %v871
        %v875 = vsel %vm787, 0, %v873
        %v876 = vcosq.f32.pop %v874
        %v877 = vsinq.f32.pop %v874
        %vm878 = vweird.f32 %v160
        %v879 = vadd.s32 %v875, 3
        %v880 = vand.u32 %v879, 3
        %vm881 = vcmp.lt.s32.totalorder %v880, 2
        %vm882 = vcmp.eq.s32.totalorder %v880, 0
        %v883 = vxor.u32 %v877, 2147483648
        %v884 = vsel %vm882, %v876, %v883
        %vm885 = vcmp.eq.s32.totalorder %v880, 2
        %v886 = vxor.u32 %v876, 2147483648
        %v887 = vsel %vm885, %v886, %v877
        %v888 = vsel %vm881, %v884, %v887
        %v889 = vsel %vm878, nan, %v888
        %v890 = vand.u32 2147483647, %v161
        %vm891 = vcmp.le.f32.partialorder %v890, 0.7853982
        %vm892 = vcmp.lt.s32.totalorder %v161, 0
        %v893 = vand.u32 %v161, 2139095040
        %v894 = vshrl.u32 %v893, 23
        %v895 = vsub.s32 %v894, 127
        %v896 = vand.u32 2147483647, %v161
        %v897 = vand.u32 %v896, 8388607
        %v898 = vor.u32 %v897, 8388608
        %v899 = vsub.s32 0, %v898
        %v900 = vadd.s32 %v895, 1
        %vm901 = vcmp.gt.s32.totalorder %v900, 0
        %v902 = vsel %vm901, %v900, 0
        %v903 = vshrl.u32 %v902, 5
        %v904 = vand.u32 %v902, 31
        %v905 = vsub.s32 32, %v904
        %v906 = vshrl.u32 683565275, %v905
        %v907 = vshll.u32 683565275, %v904
        %v908 = vshrl.u32 2475754826, %v905
        %v909 = vor.u32 %v907, %v908
        %v910 = vshll.u32 2475754826, %v904
        %v911 = vshrl.u32 2131351028, %v905
        %v912 = vor.u32 %v910, %v911
        %v913 = vshll.u32 2131351028, %v904
        %v914 = vshrl.u32 2102212464, %v905
        %v915 = vor.u32 %v913, %v914
        %v916 = vshll.u32 2102212464, %v904
        %v917 = vshrl.u32 920167782, %v905
        %v918 = vor.u32 %v916, %v917
        %v919 = vshll.u32 920167782, %v904
        %v920 = vshrl.u32 1326507024, %v905
        %v921 = vor.u32 %v919, %v920
        %vm922 = vcmp.lt.s32.totalorder %v903, 1
        %vm923 = vcmp.lt.s32.totalorder %v903, 2
        %vm924 = vcmp.lt.s32.totalorder %v903, 3
        %vm925 = vcmp.lt.s32.totalorder %v903, 4
        %v926 = vsel %vm922, %v906, %v909
        %v927 = vsel %vm925, %v915, 2102212464
        %v928 = vsel %vm924, %v912, %v927
        %v929 = vsel %vm923, %v926, %v928
        %v930 = vsel %vm922, %v909, %v912
        %v931 = vsel %vm925, %v918, 920167782
        %v932 = vsel %vm924, %v915, %v931
        %v933 = vsel %vm923, %v930, %v932
        %v934 = vsel %vm922, %v912, %v915
        %v935 = vsel %vm925, %v921, 1326507024
        %v936 = vsel %vm924, %v918, %v935
        %v937 = vsel %vm923, %v934, %v936
        %v938 = vshll.u32 %v898, 8
        %v939 = vmul.u32.u64.compose %v938, %v937
        %v940 = vextract.low.u32 %v939
        %v941 = vextract.high.u32 %v939
        %v942 = vmul.u32.u64.compose %v938, %v933
        %v943 = vextract.low.u32 %v942
        %v944 = vextract.high.u32 %v942
        %v945 = vmul.u32 %v938, %v929
        %v946 = vadd.s32 %v941, %v943
        %vm947 = vc.u32 %v941, %v943
        %v948 = vadd.s32 %v944, 1
        %v949 = vsel %vm947, %v948, %v944
        %v950 = vadd.s32 %v945, %v949
        %v951 = vadd.s32 %v950, 536870912
        %v952 = vshrl.u32 %v951, 30
        %v953 = vshll.u32 %v952, 30
        %v954 = vsub.s32 %v950, %v953
        %vm955 = vcmp.lt.s32.totalorder %v954, 0
        %v956 = vsub.s32 0, %v954
        %v957 = vsel %vm955, %v956, %v954
        %v958 = vclz %v957
        %v959 = vsub.s32 %v958, 2
        %vm960 = vcmp.gt.s32.totalorder 0, %v959
        %v961 = vsel %vm960, 0, %v959
        %v962 = vsub.s32 32, %v961
        %v963 = vshll.u32 %v954, %v961
        %v964 = vshrl.u32 %v946, %v962
        %v965 = vor.u32 %v963, %v964
        %v966 = vsub.s32 4294967266, %v961
        %v967 = vadd.s32 %v966, 127
        %v968 = vshll.u32 %v967, 23
        %v969 = vor.u32 4788187, %v968
        %v970 = vand.u32 2147483647, %v969
        %v972 = vcvt.s32.f32 %v965
        %v973 = vmul.f32 %v972, %v970
        %v974 = vxor.u32 %v973, 2147483648
        %v975 = vsel %vm892, %v974, %v973
        %v976 = vsub.s32 4, %v952
        %v977 = vsel %vm892, %v976, %v952
        %v978 = vsel %vm891, %v161, %v975
        %v979 = vsel %vm891, 0, %v977
        %v980 = vcosq.f32.pop %v978
        %v981 = vsinq.f32.pop %v978
        %vm982 = vweird.f32 %v161
        %v983 = vadd.s32 %v979, 3
        %v984 = vand.u32 %v983, 3
        %vm985 = vcmp.lt.s32.totalorder %v984, 2
        %vm986 = vcmp.eq.s32.totalorder %v984, 0
        %v987 = vxor.u32 %v981, 2147483648
        %v988 = vsel %vm986, %v980, %v987
        %vm989 = vcmp.eq.s32.totalorder %v984, 2
        %v990 = vxor.u32 %v980, 2147483648
        %v991 = vsel %vm989, %v990, %v981
        %v992 = vsel %vm985, %v988, %v991
        %v993 = vsel %vm982, nan, %v992
        %v994 = vand.u32 2147483647, %v154
        %vm995 = vcmp.le.f32.partialorder %v994, 0.7853982
        %vm996 = vcmp.lt.s32.totalorder %v154, 0
        %v997 = vand.u32 %v154, 2139095040
        %v998 = vshrl.u32 %v997, 23
        %v999 = vsub.s32 %v998, 127
        %v1000 = vand.u32 2147483647, %v154
        %v1001 = vand.u32 %v1000, 8388607
        %v1002 = vor.u32 %v1001, 8388608
        %v1003 = vsub.s32 0, %v1002
        %v1004 = vadd.s32 %v999, 1
        %vm1005 = vcmp.gt.s32.totalorder %v1004, 0
        %v1006 = vsel %vm1005, %v1004, 0
        %v1007 = vshrl.u32 %v1006, 5
        %v1008 = vand.u32 %v1006, 31
        %v1009 = vsub.s32 32, %v1008
        %v1010 = vshrl.u32 683565275, %v1009
        %v1011 = vshll.u32 683565275, %v1008
        %v1012 = vshrl.u32 2475754826, %v1009
        %v1013 = vor.u32 %v1011, %v1012
        %v1014 = vshll.u32 2475754826, %v1008
        %v1015 = vshrl.u32 2131351028, %v1009
        %v1016 = vor.u32 %v1014, %v1015
        %v1017 = vshll.u32 2131351028, %v1008
        %v1018 = vshrl.u32 2102212464, %v1009
        %v1019 = vor.u32 %v1017, %v1018
        %v1020 = vshll.u32 2102212464, %v1008
        %v1021 = vshrl.u32 920167782, %v1009
        %v1022 = vor.u32 %v1020, %v1021
        %v1023 = vshll.u32 920167782, %v1008
        %v1024 = vshrl.u32 1326507024, %v1009
        %v1025 = vor.u32 %v1023, %v1024
        %vm1026 = vcmp.lt.s32.totalorder %v1007, 1
        %vm1027 = vcmp.lt.s32.totalorder %v1007, 2
        %vm1028 = vcmp.lt.s32.totalorder %v1007, 3
        %vm1029 = vcmp.lt.s32.totalorder %v1007, 4
        %v1030 = vsel %vm1026, %v1010, %v1013
        %v1031 = vsel %vm1029, %v1019, 2102212464
        %v1032 = vsel %vm1028, %v1016, %v1031
        %v1033 = vsel %vm1027, %v1030, %v1032
        %v1034 = vsel %vm1026, %v1013, %v1016
        %v1035 = vsel %vm1029, %v1022, 920167782
        %v1036 = vsel %vm1028, %v1019, %v1035
        %v1037 = vsel %vm1027, %v1034, %v1036
        %v1038 = vsel %vm1026, %v1016, %v1019
        %v1039 = vsel %vm1029, %v1025, 1326507024
        %v1040 = vsel %vm1028, %v1022, %v1039
        %v1041 = vsel %vm1027, %v1038, %v1040
        %v1042 = vshll.u32 %v1002, 8
        %v1043 = vmul.u32.u64.compose %v1042, %v1041
        %v1044 = vextract.low.u32 %v1043
        %v1045 = vextract.high.u32 %v1043
        %v1046 = vmul.u32.u64.compose %v1042, %v1037
        %v1047 = vextract.low.u32 %v1046
        %v1048 = vextract.high.u32 %v1046
        %v1049 = vmul.u32 %v1042, %v1033
        %v1050 = vadd.s32 %v1045, %v1047
        %vm1051 = vc.u32 %v1045, %v1047
        %v1052 = vadd.s32 %v1048, 1
        %v1053 = vsel %vm1051, %v1052, %v1048
        %v1054 = vadd.s32 %v1049, %v1053
        %v1055 = vadd.s32 %v1054, 536870912
        %v1056 = vshrl.u32 %v1055, 30
        %v1057 = vshll.u32 %v1056, 30
        %v1058 = vsub.s32 %v1054, %v1057
        %vm1059 = vcmp.lt.s32.totalorder %v1058, 0
        %v1060 = vsub.s32 0, %v1058
        %v1061 = vsel %vm1059, %v1060, %v1058
        %v1062 = vclz %v1061
        %v1063 = vsub.s32 %v1062, 2
        %vm1064 = vcmp.gt.s32.totalorder 0, %v1063
        %v1065 = vsel %vm1064, 0, %v1063
        %v1066 = vsub.s32 32, %v1065
        %v1067 = vshll.u32 %v1058, %v1065
        %v1068 = vshrl.u32 %v1050, %v1066
        %v1069 = vor.u32 %v1067, %v1068
        %v1070 = vsub.s32 4294967266, %v1065
        %v1071 = vadd.s32 %v1070, 127
        %v1072 = vshll.u32 %v1071, 23
        %v1073 = vor.u32 4788187, %v1072
        %v1074 = vand.u32 2147483647, %v1073
        %v1076 = vcvt.s32.f32 %v1069
        %v1077 = vmul.f32 %v1076, %v1074
        %v1078 = vxor.u32 %v1077, 2147483648
        %v1079 = vsel %vm996, %v1078, %v1077
        %v1080 = vsub.s32 4, %v1056
        %v1081 = vsel %vm996, %v1080, %v1056
        %v1082 = vsel %vm995, %v154, %v1079
        %v1083 = vsel %vm995, 0, %v1081
        %v1084 = vcosq.f32.pop %v1082
        %v1085 = vsinq.f32.pop %v1082
        %vm1086 = vweird.f32 %v154
        %v1087 = vand.u32 %v1083, 3
        %vm1088 = vcmp.lt.s32.totalorder %v1087, 2
        %vm1089 = vcmp.eq.s32.totalorder %v1087, 0
        %v1090 = vxor.u32 %v1085, 2147483648
        %v1091 = vsel %vm1089, %v1084, %v1090
        %vm1092 = vcmp.eq.s32.totalorder %v1087, 2
        %v1093 = vxor.u32 %v1084, 2147483648
        %v1094 = vsel %vm1092, %v1093, %v1085
        %v1095 = vsel %vm1088, %v1091, %v1094
        %v1096 = vsel %vm1086, nan, %v1095
        %v1097 = vand.u32 2147483647, %v155
        %vm1098 = vcmp.le.f32.partialorder %v1097, 0.7853982
        %vm1099 = vcmp.lt.s32.totalorder %v155, 0
        %v1100 = vand.u32 %v155, 2139095040
        %v1101 = vshrl.u32 %v1100, 23
        %v1102 = vsub.s32 %v1101, 127
        %v1103 = vand.u32 2147483647, %v155
        %v1104 = vand.u32 %v1103, 8388607
        %v1105 = vor.u32 %v1104, 8388608
        %v1106 = vsub.s32 0, %v1105
        %v1107 = vadd.s32 %v1102, 1
        %vm1108 = vcmp.gt.s32.totalorder %v1107, 0
        %v1109 = vsel %vm1108, %v1107, 0
        %v1110 = vshrl.u32 %v1109, 5
        %v1111 = vand.u32 %v1109, 31
        %v1112 = vsub.s32 32, %v1111
        %v1113 = vshrl.u32 683565275, %v1112
        %v1114 = vshll.u32 683565275, %v1111
        %v1115 = vshrl.u32 2475754826, %v1112
        %v1116 = vor.u32 %v1114, %v1115
        %v1117 = vshll.u32 2475754826, %v1111
        %v1118 = vshrl.u32 2131351028, %v1112
        %v1119 = vor.u32 %v1117, %v1118
        %v1120 = vshll.u32 2131351028, %v1111
        %v1121 = vshrl.u32 2102212464, %v1112
        %v1122 = vor.u32 %v1120, %v1121
        %v1123 = vshll.u32 2102212464, %v1111
        %v1124 = vshrl.u32 920167782, %v1112
        %v1125 = vor.u32 %v1123, %v1124
        %v1126 = vshll.u32 920167782, %v1111
        %v1127 = vshrl.u32 1326507024, %v1112
        %v1128 = vor.u32 %v1126, %v1127
        %vm1129 = vcmp.lt.s32.totalorder %v1110, 1
        %vm1130 = vcmp.lt.s32.totalorder %v1110, 2
        %vm1131 = vcmp.lt.s32.totalorder %v1110, 3
        %vm1132 = vcmp.lt.s32.totalorder %v1110, 4
        %v1133 = vsel %vm1129, %v1113, %v1116
        %v1134 = vsel %vm1132, %v1122, 2102212464
        %v1135 = vsel %vm1131, %v1119, %v1134
        %v1136 = vsel %vm1130, %v1133, %v1135
        %v1137 = vsel %vm1129, %v1116, %v1119
        %v1138 = vsel %vm1132, %v1125, 920167782
        %v1139 = vsel %vm1131, %v1122, %v1138
        %v1140 = vsel %vm1130, %v1137, %v1139
        %v1141 = vsel %vm1129, %v1119, %v1122
        %v1142 = vsel %vm1132, %v1128, 1326507024
        %v1143 = vsel %vm1131, %v1125, %v1142
        %v1144 = vsel %vm1130, %v1141, %v1143
        %v1145 = vshll.u32 %v1105, 8
        %v1146 = vmul.u32.u64.compose %v1145, %v1144
        %v1147 = vextract.low.u32 %v1146
        %v1148 = vextract.high.u32 %v1146
        %v1149 = vmul.u32.u64.compose %v1145, %v1140
        %v1150 = vextract.low.u32 %v1149
        %v1151 = vextract.high.u32 %v1149
        %v1152 = vmul.u32 %v1145, %v1136
        %v1153 = vadd.s32 %v1148, %v1150
        %vm1154 = vc.u32 %v1148, %v1150
        %v1155 = vadd.s32 %v1151, 1
        %v1156 = vsel %vm1154, %v1155, %v1151
        %v1157 = vadd.s32 %v1152, %v1156
        %v1158 = vadd.s32 %v1157, 536870912
        %v1159 = vshrl.u32 %v1158, 30
        %v1160 = vshll.u32 %v1159, 30
        %v1161 = vsub.s32 %v1157, %v1160
        %vm1162 = vcmp.lt.s32.totalorder %v1161, 0
        %v1163 = vsub.s32 0, %v1161
        %v1164 = vsel %vm1162, %v1163, %v1161
        %v1165 = vclz %v1164
        %v1166 = vsub.s32 %v1165, 2
        %vm1167 = vcmp.gt.s32.totalorder 0, %v1166
        %v1168 = vsel %vm1167, 0, %v1166
        %v1169 = vsub.s32 32, %v1168
        %v1170 = vshll.u32 %v1161, %v1168
        %v1171 = vshrl.u32 %v1153, %v1169
        %v1172 = vor.u32 %v1170, %v1171
        %v1173 = vsub.s32 4294967266, %v1168
        %v1174 = vadd.s32 %v1173, 127
        %v1175 = vshll.u32 %v1174, 23
        %v1176 = vor.u32 4788187, %v1175
        %v1177 = vand.u32 2147483647, %v1176
        %v1179 = vcvt.s32.f32 %v1172
        %v1180 = vmul.f32 %v1179, %v1177
        %v1181 = vxor.u32 %v1180, 2147483648
        %v1182 = vsel %vm1099, %v1181, %v1180
        %v1183 = vsub.s32 4, %v1159
        %v1184 = vsel %vm1099, %v1183, %v1159
        %v1185 = vsel %vm1098, %v155, %v1182
        %v1186 = vsel %vm1098, 0, %v1184
        %v1187 = vcosq.f32.pop %v1185
        %v1188 = vsinq.f32.pop %v1185
        %vm1189 = vweird.f32 %v155
        %v1190 = vand.u32 %v1186, 3
        %vm1191 = vcmp.lt.s32.totalorder %v1190, 2
        %vm1192 = vcmp.eq.s32.totalorder %v1190, 0
        %v1193 = vxor.u32 %v1188, 2147483648
        %v1194 = vsel %vm1192, %v1187, %v1193
        %vm1195 = vcmp.eq.s32.totalorder %v1190, 2
        %v1196 = vxor.u32 %v1187, 2147483648
        %v1197 = vsel %vm1195, %v1196, %v1188
        %v1198 = vsel %vm1191, %v1194, %v1197
        %v1199 = vsel %vm1189, nan, %v1198
        %v1200 = vand.u32 2147483647, %v156
        %vm1201 = vcmp.le.f32.partialorder %v1200, 0.7853982
        %vm1202 = vcmp.lt.s32.totalorder %v156, 0
        %v1203 = vand.u32 %v156, 2139095040
        %v1204 = vshrl.u32 %v1203, 23
        %v1205 = vsub.s32 %v1204, 127
        %v1206 = vand.u32 2147483647, %v156
        %v1207 = vand.u32 %v1206, 8388607
        %v1208 = vor.u32 %v1207, 8388608
        %v1209 = vsub.s32 0, %v1208
        %v1210 = vadd.s32 %v1205, 1
        %vm1211 = vcmp.gt.s32.totalorder %v1210, 0
        %v1212 = vsel %vm1211, %v1210, 0
        %v1213 = vshrl.u32 %v1212, 5
        %v1214 = vand.u32 %v1212, 31
        %v1215 = vsub.s32 32, %v1214
        %v1216 = vshrl.u32 683565275, %v1215
        %v1217 = vshll.u32 683565275, %v1214
        %v1218 = vshrl.u32 2475754826, %v1215
        %v1219 = vor.u32 %v1217, %v1218
        %v1220 = vshll.u32 2475754826, %v1214
        %v1221 = vshrl.u32 2131351028, %v1215
        %v1222 = vor.u32 %v1220, %v1221
        %v1223 = vshll.u32 2131351028, %v1214
        %v1224 = vshrl.u32 2102212464, %v1215
        %v1225 = vor.u32 %v1223, %v1224
        %v1226 = vshll.u32 2102212464, %v1214
        %v1227 = vshrl.u32 920167782, %v1215
        %v1228 = vor.u32 %v1226, %v1227
        %v1229 = vshll.u32 920167782, %v1214
        %v1230 = vshrl.u32 1326507024, %v1215
        %v1231 = vor.u32 %v1229, %v1230
        %vm1232 = vcmp.lt.s32.totalorder %v1213, 1
        %vm1233 = vcmp.lt.s32.totalorder %v1213, 2
        %vm1234 = vcmp.lt.s32.totalorder %v1213, 3
        %vm1235 = vcmp.lt.s32.totalorder %v1213, 4
        %v1236 = vsel %vm1232, %v1216, %v1219
        %v1237 = vsel %vm1235, %v1225, 2102212464
        %v1238 = vsel %vm1234, %v1222, %v1237
        %v1239 = vsel %vm1233, %v1236, %v1238
        %v1240 = vsel %vm1232, %v1219, %v1222
        %v1241 = vsel %vm1235, %v1228, 920167782
        %v1242 = vsel %vm1234, %v1225, %v1241
        %v1243 = vsel %vm1233, %v1240, %v1242
        %v1244 = vsel %vm1232, %v1222, %v1225
        %v1245 = vsel %vm1235, %v1231, 1326507024
        %v1246 = vsel %vm1234, %v1228, %v1245
        %v1247 = vsel %vm1233, %v1244, %v1246
        %v1248 = vshll.u32 %v1208, 8
        %v1249 = vmul.u32.u64.compose %v1248, %v1247
        %v1250 = vextract.low.u32 %v1249
        %v1251 = vextract.high.u32 %v1249
        %v1252 = vmul.u32.u64.compose %v1248, %v1243
        %v1253 = vextract.low.u32 %v1252
        %v1254 = vextract.high.u32 %v1252
        %v1255 = vmul.u32 %v1248, %v1239
        %v1256 = vadd.s32 %v1251, %v1253
        %vm1257 = vc.u32 %v1251, %v1253
        %v1258 = vadd.s32 %v1254, 1
        %v1259 = vsel %vm1257, %v1258, %v1254
        %v1260 = vadd.s32 %v1255, %v1259
        %v1261 = vadd.s32 %v1260, 536870912
        %v1262 = vshrl.u32 %v1261, 30
        %v1263 = vshll.u32 %v1262, 30
        %v1264 = vsub.s32 %v1260, %v1263
        %vm1265 = vcmp.lt.s32.totalorder %v1264, 0
        %v1266 = vsub.s32 0, %v1264
        %v1267 = vsel %vm1265, %v1266, %v1264
        %v1268 = vclz %v1267
        %v1269 = vsub.s32 %v1268, 2
        %vm1270 = vcmp.gt.s32.totalorder 0, %v1269
        %v1271 = vsel %vm1270, 0, %v1269
        %v1272 = vsub.s32 32, %v1271
        %v1273 = vshll.u32 %v1264, %v1271
        %v1274 = vshrl.u32 %v1256, %v1272
        %v1275 = vor.u32 %v1273, %v1274
        %v1276 = vsub.s32 4294967266, %v1271
        %v1277 = vadd.s32 %v1276, 127
        %v1278 = vshll.u32 %v1277, 23
        %v1279 = vor.u32 4788187, %v1278
        %v1280 = vand.u32 2147483647, %v1279
        %v1282 = vcvt.s32.f32 %v1275
        %v1283 = vmul.f32 %v1282, %v1280
        %v1284 = vxor.u32 %v1283, 2147483648
        %v1285 = vsel %vm1202, %v1284, %v1283
        %v1286 = vsub.s32 4, %v1262
        %v1287 = vsel %vm1202, %v1286, %v1262
        %v1288 = vsel %vm1201, %v156, %v1285
        %v1289 = vsel %vm1201, 0, %v1287
        %v1290 = vcosq.f32.pop %v1288
        %v1291 = vsinq.f32.pop %v1288
        %vm1292 = vweird.f32 %v156
        %v1293 = vand.u32 %v1289, 3
        %vm1294 = vcmp.lt.s32.totalorder %v1293, 2
        %vm1295 = vcmp.eq.s32.totalorder %v1293, 0
        %v1296 = vxor.u32 %v1291, 2147483648
        %v1297 = vsel %vm1295, %v1290, %v1296
        %vm1298 = vcmp.eq.s32.totalorder %v1293, 2
        %v1299 = vxor.u32 %v1290, 2147483648
        %v1300 = vsel %vm1298, %v1299, %v1291
        %v1301 = vsel %vm1294, %v1297, %v1300
        %v1302 = vsel %vm1292, nan, %v1301
        %v1303 = vand.u32 2147483647, %v157
        %vm1304 = vcmp.le.f32.partialorder %v1303, 0.7853982
        %vm1305 = vcmp.lt.s32.totalorder %v157, 0
        %v1306 = vand.u32 %v157, 2139095040
        %v1307 = vshrl.u32 %v1306, 23
        %v1308 = vsub.s32 %v1307, 127
        %v1309 = vand.u32 2147483647, %v157
        %v1310 = vand.u32 %v1309, 8388607
        %v1311 = vor.u32 %v1310, 8388608
        %v1312 = vsub.s32 0, %v1311
        %v1313 = vadd.s32 %v1308, 1
        %vm1314 = vcmp.gt.s32.totalorder %v1313, 0
        %v1315 = vsel %vm1314, %v1313, 0
        %v1316 = vshrl.u32 %v1315, 5
        %v1317 = vand.u32 %v1315, 31
        %v1318 = vsub.s32 32, %v1317
        %v1319 = vshrl.u32 683565275, %v1318
        %v1320 = vshll.u32 683565275, %v1317
        %v1321 = vshrl.u32 2475754826, %v1318
        %v1322 = vor.u32 %v1320, %v1321
        %v1323 = vshll.u32 2475754826, %v1317
        %v1324 = vshrl.u32 2131351028, %v1318
        %v1325 = vor.u32 %v1323, %v1324
        %v1326 = vshll.u32 2131351028, %v1317
        %v1327 = vshrl.u32 2102212464, %v1318
        %v1328 = vor.u32 %v1326, %v1327
        %v1329 = vshll.u32 2102212464, %v1317
        %v1330 = vshrl.u32 920167782, %v1318
        %v1331 = vor.u32 %v1329, %v1330
        %v1332 = vshll.u32 920167782, %v1317
        %v1333 = vshrl.u32 1326507024, %v1318
        %v1334 = vor.u32 %v1332, %v1333
        %vm1335 = vcmp.lt.s32.totalorder %v1316, 1
        %vm1336 = vcmp.lt.s32.totalorder %v1316, 2
        %vm1337 = vcmp.lt.s32.totalorder %v1316, 3
        %vm1338 = vcmp.lt.s32.totalorder %v1316, 4
        %v1339 = vsel %vm1335, %v1319, %v1322
        %v1340 = vsel %vm1338, %v1328, 2102212464
        %v1341 = vsel %vm1337, %v1325, %v1340
        %v1342 = vsel %vm1336, %v1339, %v1341
        %v1343 = vsel %vm1335, %v1322, %v1325
        %v1344 = vsel %vm1338, %v1331, 920167782
        %v1345 = vsel %vm1337, %v1328, %v1344
        %v1346 = vsel %vm1336, %v1343, %v1345
        %v1347 = vsel %vm1335, %v1325, %v1328
        %v1348 = vsel %vm1338, %v1334, 1326507024
        %v1349 = vsel %vm1337, %v1331, %v1348
        %v1350 = vsel %vm1336, %v1347, %v1349
        %v1351 = vshll.u32 %v1311, 8
        %v1352 = vmul.u32.u64.compose %v1351, %v1350
        %v1353 = vextract.low.u32 %v1352
        %v1354 = vextract.high.u32 %v1352
        %v1355 = vmul.u32.u64.compose %v1351, %v1346
        %v1356 = vextract.low.u32 %v1355
        %v1357 = vextract.high.u32 %v1355
        %v1358 = vmul.u32 %v1351, %v1342
        %v1359 = vadd.s32 %v1354, %v1356
        %vm1360 = vc.u32 %v1354, %v1356
        %v1361 = vadd.s32 %v1357, 1
        %v1362 = vsel %vm1360, %v1361, %v1357
        %v1363 = vadd.s32 %v1358, %v1362
        %v1364 = vadd.s32 %v1363, 536870912
        %v1365 = vshrl.u32 %v1364, 30
        %v1366 = vshll.u32 %v1365, 30
        %v1367 = vsub.s32 %v1363, %v1366
        %vm1368 = vcmp.lt.s32.totalorder %v1367, 0
        %v1369 = vsub.s32 0, %v1367
        %v1370 = vsel %vm1368, %v1369, %v1367
        %v1371 = vclz %v1370
        %v1372 = vsub.s32 %v1371, 2
        %vm1373 = vcmp.gt.s32.totalorder 0, %v1372
        %v1374 = vsel %vm1373, 0, %v1372
        %v1375 = vsub.s32 32, %v1374
        %v1376 = vshll.u32 %v1367, %v1374
        %v1377 = vshrl.u32 %v1359, %v1375
        %v1378 = vor.u32 %v1376, %v1377
        %v1379 = vsub.s32 4294967266, %v1374
        %v1380 = vadd.s32 %v1379, 127
        %v1381 = vshll.u32 %v1380, 23
        %v1382 = vor.u32 4788187, %v1381
        %v1383 = vand.u32 2147483647, %v1382
        %v1385 = vcvt.s32.f32 %v1378
        %v1386 = vmul.f32 %v1385, %v1383
        %v1387 = vxor.u32 %v1386, 2147483648
        %v1388 = vsel %vm1305, %v1387, %v1386
        %v1389 = vsub.s32 4, %v1365
        %v1390 = vsel %vm1305, %v1389, %v1365
        %v1391 = vsel %vm1304, %v157, %v1388
        %v1392 = vsel %vm1304, 0, %v1390
        %v1393 = vcosq.f32.pop %v1391
        %v1394 = vsinq.f32.pop %v1391
        %vm1395 = vweird.f32 %v157
        %v1396 = vand.u32 %v1392, 3
        %vm1397 = vcmp.lt.s32.totalorder %v1396, 2
        %vm1398 = vcmp.eq.s32.totalorder %v1396, 0
        %v1399 = vxor.u32 %v1394, 2147483648
        %v1400 = vsel %vm1398, %v1393, %v1399
        %vm1401 = vcmp.eq.s32.totalorder %v1396, 2
        %v1402 = vxor.u32 %v1393, 2147483648
        %v1403 = vsel %vm1401, %v1402, %v1394
        %v1404 = vsel %vm1397, %v1400, %v1403
        %v1405 = vsel %vm1395, nan, %v1404
        %v1406 = vand.u32 2147483647, %v158
        %vm1407 = vcmp.le.f32.partialorder %v1406, 0.7853982
        %vm1408 = vcmp.lt.s32.totalorder %v158, 0
        %v1409 = vand.u32 %v158, 2139095040
        %v1410 = vshrl.u32 %v1409, 23
        %v1411 = vsub.s32 %v1410, 127
        %v1412 = vand.u32 2147483647, %v158
        %v1413 = vand.u32 %v1412, 8388607
        %v1414 = vor.u32 %v1413, 8388608
        %v1415 = vsub.s32 0, %v1414
        %v1416 = vadd.s32 %v1411, 1
        %vm1417 = vcmp.gt.s32.totalorder %v1416, 0
        %v1418 = vsel %vm1417, %v1416, 0
        %v1419 = vshrl.u32 %v1418, 5
        %v1420 = vand.u32 %v1418, 31
        %v1421 = vsub.s32 32, %v1420
        %v1422 = vshrl.u32 683565275, %v1421
        %v1423 = vshll.u32 683565275, %v1420
        %v1424 = vshrl.u32 2475754826, %v1421
        %v1425 = vor.u32 %v1423, %v1424
        %v1426 = vshll.u32 2475754826, %v1420
        %v1427 = vshrl.u32 2131351028, %v1421
        %v1428 = vor.u32 %v1426, %v1427
        %v1429 = vshll.u32 2131351028, %v1420
        %v1430 = vshrl.u32 2102212464, %v1421
        %v1431 = vor.u32 %v1429, %v1430
        %v1432 = vshll.u32 2102212464, %v1420
        %v1433 = vshrl.u32 920167782, %v1421
        %v1434 = vor.u32 %v1432, %v1433
        %v1435 = vshll.u32 920167782, %v1420
        %v1436 = vshrl.u32 1326507024, %v1421
        %v1437 = vor.u32 %v1435, %v1436
        %vm1438 = vcmp.lt.s32.totalorder %v1419, 1
        %vm1439 = vcmp.lt.s32.totalorder %v1419, 2
        %vm1440 = vcmp.lt.s32.totalorder %v1419, 3
        %vm1441 = vcmp.lt.s32.totalorder %v1419, 4
        %v1442 = vsel %vm1438, %v1422, %v1425
        %v1443 = vsel %vm1441, %v1431, 2102212464
        %v1444 = vsel %vm1440, %v1428, %v1443
        %v1445 = vsel %vm1439, %v1442, %v1444
        %v1446 = vsel %vm1438, %v1425, %v1428
        %v1447 = vsel %vm1441, %v1434, 920167782
        %v1448 = vsel %vm1440, %v1431, %v1447
        %v1449 = vsel %vm1439, %v1446, %v1448
        %v1450 = vsel %vm1438, %v1428, %v1431
        %v1451 = vsel %vm1441, %v1437, 1326507024
        %v1452 = vsel %vm1440, %v1434, %v1451
        %v1453 = vsel %vm1439, %v1450, %v1452
        %v1454 = vshll.u32 %v1414, 8
        %v1455 = vmul.u32.u64.compose %v1454, %v1453
        %v1456 = vextract.low.u32 %v1455
        %v1457 = vextract.high.u32 %v1455
        %v1458 = vmul.u32.u64.compose %v1454, %v1449
        %v1459 = vextract.low.u32 %v1458
        %v1460 = vextract.high.u32 %v1458
        %v1461 = vmul.u32 %v1454, %v1445
        %v1462 = vadd.s32 %v1457, %v1459
        %vm1463 = vc.u32 %v1457, %v1459
        %v1464 = vadd.s32 %v1460, 1
        %v1465 = vsel %vm1463, %v1464, %v1460
        %v1466 = vadd.s32 %v1461, %v1465
        %v1467 = vadd.s32 %v1466, 536870912
        %v1468 = vshrl.u32 %v1467, 30
        %v1469 = vshll.u32 %v1468, 30
        %v1470 = vsub.s32 %v1466, %v1469
        %vm1471 = vcmp.lt.s32.totalorder %v1470, 0
        %v1472 = vsub.s32 0, %v1470
        %v1473 = vsel %vm1471, %v1472, %v1470
        %v1474 = vclz %v1473
        %v1475 = vsub.s32 %v1474, 2
        %vm1476 = vcmp.gt.s32.totalorder 0, %v1475
        %v1477 = vsel %vm1476, 0, %v1475
        %v1478 = vsub.s32 32, %v1477
        %v1479 = vshll.u32 %v1470, %v1477
        %v1480 = vshrl.u32 %v1462, %v1478
        %v1481 = vor.u32 %v1479, %v1480
        %v1482 = vsub.s32 4294967266, %v1477
        %v1483 = vadd.s32 %v1482, 127
        %v1484 = vshll.u32 %v1483, 23
        %v1485 = vor.u32 4788187, %v1484
        %v1486 = vand.u32 2147483647, %v1485
        %v1488 = vcvt.s32.f32 %v1481
        %v1489 = vmul.f32 %v1488, %v1486
        %v1490 = vxor.u32 %v1489, 2147483648
        %v1491 = vsel %vm1408, %v1490, %v1489
        %v1492 = vsub.s32 4, %v1468
        %v1493 = vsel %vm1408, %v1492, %v1468
        %v1494 = vsel %vm1407, %v158, %v1491
        %v1495 = vsel %vm1407, 0, %v1493
        %v1496 = vcosq.f32.pop %v1494
        %v1497 = vsinq.f32.pop %v1494
        %vm1498 = vweird.f32 %v158
        %v1499 = vand.u32 %v1495, 3
        %vm1500 = vcmp.lt.s32.totalorder %v1499, 2
        %vm1501 = vcmp.eq.s32.totalorder %v1499, 0
        %v1502 = vxor.u32 %v1497, 2147483648
        %v1503 = vsel %vm1501, %v1496, %v1502
        %vm1504 = vcmp.eq.s32.totalorder %v1499, 2
        %v1505 = vxor.u32 %v1496, 2147483648
        %v1506 = vsel %vm1504, %v1505, %v1497
        %v1507 = vsel %vm1500, %v1503, %v1506
        %v1508 = vsel %vm1498, nan, %v1507
        %v1509 = vand.u32 2147483647, %v159
        %vm1510 = vcmp.le.f32.partialorder %v1509, 0.7853982
        %vm1511 = vcmp.lt.s32.totalorder %v159, 0
        %v1512 = vand.u32 %v159, 2139095040
        %v1513 = vshrl.u32 %v1512, 23
        %v1514 = vsub.s32 %v1513, 127
        %v1515 = vand.u32 2147483647, %v159
        %v1516 = vand.u32 %v1515, 8388607
        %v1517 = vor.u32 %v1516, 8388608
        %v1518 = vsub.s32 0, %v1517
        %v1519 = vadd.s32 %v1514, 1
        %vm1520 = vcmp.gt.s32.totalorder %v1519, 0
        %v1521 = vsel %vm1520, %v1519, 0
        %v1522 = vshrl.u32 %v1521, 5
        %v1523 = vand.u32 %v1521, 31
        %v1524 = vsub.s32 32, %v1523
        %v1525 = vshrl.u32 683565275, %v1524
        %v1526 = vshll.u32 683565275, %v1523
        %v1527 = vshrl.u32 2475754826, %v1524
        %v1528 = vor.u32 %v1526, %v1527
        %v1529 = vshll.u32 2475754826, %v1523
        %v1530 = vshrl.u32 2131351028, %v1524
        %v1531 = vor.u32 %v1529, %v1530
        %v1532 = vshll.u32 2131351028, %v1523
        %v1533 = vshrl.u32 2102212464, %v1524
        %v1534 = vor.u32 %v1532, %v1533
        %v1535 = vshll.u32 2102212464, %v1523
        %v1536 = vshrl.u32 920167782, %v1524
        %v1537 = vor.u32 %v1535, %v1536
        %v1538 = vshll.u32 920167782, %v1523
        %v1539 = vshrl.u32 1326507024, %v1524
        %v1540 = vor.u32 %v1538, %v1539
        %vm1541 = vcmp.lt.s32.totalorder %v1522, 1
        %vm1542 = vcmp.lt.s32.totalorder %v1522, 2
        %vm1543 = vcmp.lt.s32.totalorder %v1522, 3
        %vm1544 = vcmp.lt.s32.totalorder %v1522, 4
        %v1545 = vsel %vm1541, %v1525, %v1528
        %v1546 = vsel %vm1544, %v1534, 2102212464
        %v1547 = vsel %vm1543, %v1531, %v1546
        %v1548 = vsel %vm1542, %v1545, %v1547
        %v1549 = vsel %vm1541, %v1528, %v1531
        %v1550 = vsel %vm1544, %v1537, 920167782
        %v1551 = vsel %vm1543, %v1534, %v1550
        %v1552 = vsel %vm1542, %v1549, %v1551
        %v1553 = vsel %vm1541, %v1531, %v1534
        %v1554 = vsel %vm1544, %v1540, 1326507024
        %v1555 = vsel %vm1543, %v1537, %v1554
        %v1556 = vsel %vm1542, %v1553, %v1555
        %v1557 = vshll.u32 %v1517, 8
        %v1558 = vmul.u32.u64.compose %v1557, %v1556
        %v1559 = vextract.low.u32 %v1558
        %v1560 = vextract.high.u32 %v1558
        %v1561 = vmul.u32.u64.compose %v1557, %v1552
        %v1562 = vextract.low.u32 %v1561
        %v1563 = vextract.high.u32 %v1561
        %v1564 = vmul.u32 %v1557, %v1548
        %v1565 = vadd.s32 %v1560, %v1562
        %vm1566 = vc.u32 %v1560, %v1562
        %v1567 = vadd.s32 %v1563, 1
        %v1568 = vsel %vm1566, %v1567, %v1563
        %v1569 = vadd.s32 %v1564, %v1568
        %v1570 = vadd.s32 %v1569, 536870912
        %v1571 = vshrl.u32 %v1570, 30
        %v1572 = vshll.u32 %v1571, 30
        %v1573 = vsub.s32 %v1569, %v1572
        %vm1574 = vcmp.lt.s32.totalorder %v1573, 0
        %v1575 = vsub.s32 0, %v1573
        %v1576 = vsel %vm1574, %v1575, %v1573
        %v1577 = vclz %v1576
        %v1578 = vsub.s32 %v1577, 2
        %vm1579 = vcmp.gt.s32.totalorder 0, %v1578
        %v1580 = vsel %vm1579, 0, %v1578
        %v1581 = vsub.s32 32, %v1580
        %v1582 = vshll.u32 %v1573, %v1580
        %v1583 = vshrl.u32 %v1565, %v1581
        %v1584 = vor.u32 %v1582, %v1583
        %v1585 = vsub.s32 4294967266, %v1580
        %v1586 = vadd.s32 %v1585, 127
        %v1587 = vshll.u32 %v1586, 23
        %v1588 = vor.u32 4788187, %v1587
        %v1589 = vand.u32 2147483647, %v1588
        %v1591 = vcvt.s32.f32 %v1584
        %v1592 = vmul.f32 %v1591, %v1589
        %v1593 = vxor.u32 %v1592, 2147483648
        %v1594 = vsel %vm1511, %v1593, %v1592
        %v1595 = vsub.s32 4, %v1571
        %v1596 = vsel %vm1511, %v1595, %v1571
        %v1597 = vsel %vm1510, %v159, %v1594
        %v1598 = vsel %vm1510, 0, %v1596
        %v1599 = vcosq.f32.pop %v1597
        %v1600 = vsinq.f32.pop %v1597
        %vm1601 = vweird.f32 %v159
        %v1602 = vand.u32 %v1598, 3
        %vm1603 = vcmp.lt.s32.totalorder %v1602, 2
        %vm1604 = vcmp.eq.s32.totalorder %v1602, 0
        %v1605 = vxor.u32 %v1600, 2147483648
        %v1606 = vsel %vm1604, %v1599, %v1605
        %vm1607 = vcmp.eq.s32.totalorder %v1602, 2
        %v1608 = vxor.u32 %v1599, 2147483648
        %v1609 = vsel %vm1607, %v1608, %v1600
        %v1610 = vsel %vm1603, %v1606, %v1609
        %v1611 = vsel %vm1601, nan, %v1610
        %v1612 = vand.u32 2147483647, %v160
        %vm1613 = vcmp.le.f32.partialorder %v1612, 0.7853982
        %vm1614 = vcmp.lt.s32.totalorder %v160, 0
        %v1615 = vand.u32 %v160, 2139095040
        %v1616 = vshrl.u32 %v1615, 23
        %v1617 = vsub.s32 %v1616, 127
        %v1618 = vand.u32 2147483647, %v160
        %v1619 = vand.u32 %v1618, 8388607
        %v1620 = vor.u32 %v1619, 8388608
        %v1621 = vsub.s32 0, %v1620
        %v1622 = vadd.s32 %v1617, 1
        %vm1623 = vcmp.gt.s32.totalorder %v1622, 0
        %v1624 = vsel %vm1623, %v1622, 0
        %v1625 = vshrl.u32 %v1624, 5
        %v1626 = vand.u32 %v1624, 31
        %v1627 = vsub.s32 32, %v1626
        %v1628 = vshrl.u32 683565275, %v1627
        %v1629 = vshll.u32 683565275, %v1626
        %v1630 = vshrl.u32 2475754826, %v1627
        %v1631 = vor.u32 %v1629, %v1630
        %v1632 = vshll.u32 2475754826, %v1626
        %v1633 = vshrl.u32 2131351028, %v1627
        %v1634 = vor.u32 %v1632, %v1633
        %v1635 = vshll.u32 2131351028, %v1626
        %v1636 = vshrl.u32 2102212464, %v1627
        %v1637 = vor.u32 %v1635, %v1636
        %v1638 = vshll.u32 2102212464, %v1626
        %v1639 = vshrl.u32 920167782, %v1627
        %v1640 = vor.u32 %v1638, %v1639
        %v1641 = vshll.u32 920167782, %v1626
        %v1642 = vshrl.u32 1326507024, %v1627
        %v1643 = vor.u32 %v1641, %v1642
        %vm1644 = vcmp.lt.s32.totalorder %v1625, 1
        %vm1645 = vcmp.lt.s32.totalorder %v1625, 2
        %vm1646 = vcmp.lt.s32.totalorder %v1625, 3
        %vm1647 = vcmp.lt.s32.totalorder %v1625, 4
        %v1648 = vsel %vm1644, %v1628, %v1631
        %v1649 = vsel %vm1647, %v1637, 2102212464
        %v1650 = vsel %vm1646, %v1634, %v1649
        %v1651 = vsel %vm1645, %v1648, %v1650
        %v1652 = vsel %vm1644, %v1631, %v1634
        %v1653 = vsel %vm1647, %v1640, 920167782
        %v1654 = vsel %vm1646, %v1637, %v1653
        %v1655 = vsel %vm1645, %v1652, %v1654
        %v1656 = vsel %vm1644, %v1634, %v1637
        %v1657 = vsel %vm1647, %v1643, 1326507024
        %v1658 = vsel %vm1646, %v1640, %v1657
        %v1659 = vsel %vm1645, %v1656, %v1658
        %v1660 = vshll.u32 %v1620, 8
        %v1661 = vmul.u32.u64.compose %v1660, %v1659
        %v1662 = vextract.low.u32 %v1661
        %v1663 = vextract.high.u32 %v1661
        %v1664 = vmul.u32.u64.compose %v1660, %v1655
        %v1665 = vextract.low.u32 %v1664
        %v1666 = vextract.high.u32 %v1664
        %v1667 = vmul.u32 %v1660, %v1651
        %v1668 = vadd.s32 %v1663, %v1665
        %vm1669 = vc.u32 %v1663, %v1665
        %v1670 = vadd.s32 %v1666, 1
        %v1671 = vsel %vm1669, %v1670, %v1666
        %v1672 = vadd.s32 %v1667, %v1671
        %v1673 = vadd.s32 %v1672, 536870912
        %v1674 = vshrl.u32 %v1673, 30
        %v1675 = vshll.u32 %v1674, 30
        %v1676 = vsub.s32 %v1672, %v1675
        %vm1677 = vcmp.lt.s32.totalorder %v1676, 0
        %v1678 = vsub.s32 0, %v1676
        %v1679 = vsel %vm1677, %v1678, %v1676
        %v1680 = vclz %v1679
        %v1681 = vsub.s32 %v1680, 2
        %vm1682 = vcmp.gt.s32.totalorder 0, %v1681
        %v1683 = vsel %vm1682, 0, %v1681
        %v1684 = vsub.s32 32, %v1683
        %v1685 = vshll.u32 %v1676, %v1683
        %v1686 = vshrl.u32 %v1668, %v1684
        %v1687 = vor.u32 %v1685, %v1686
        %v1688 = vsub.s32 4294967266, %v1683
        %v1689 = vadd.s32 %v1688, 127
        %v1690 = vshll.u32 %v1689, 23
        %v1691 = vor.u32 4788187, %v1690
        %v1692 = vand.u32 2147483647, %v1691
        %v1694 = vcvt.s32.f32 %v1687
        %v1695 = vmul.f32 %v1694, %v1692
        %v1696 = vxor.u32 %v1695, 2147483648
        %v1697 = vsel %vm1614, %v1696, %v1695
        %v1698 = vsub.s32 4, %v1674
        %v1699 = vsel %vm1614, %v1698, %v1674
        %v1700 = vsel %vm1613, %v160, %v1697
        %v1701 = vsel %vm1613, 0, %v1699
        %v1702 = vcosq.f32.pop %v1700
        %v1703 = vsinq.f32.pop %v1700
        %vm1704 = vweird.f32 %v160
        %v1705 = vand.u32 %v1701, 3
        %vm1706 = vcmp.lt.s32.totalorder %v1705, 2
        %vm1707 = vcmp.eq.s32.totalorder %v1705, 0
        %v1708 = vxor.u32 %v1703, 2147483648
        %v1709 = vsel %vm1707, %v1702, %v1708
        %vm1710 = vcmp.eq.s32.totalorder %v1705, 2
        %v1711 = vxor.u32 %v1702, 2147483648
        %v1712 = vsel %vm1710, %v1711, %v1703
        %v1713 = vsel %vm1706, %v1709, %v1712
        %v1714 = vsel %vm1704, nan, %v1713
        %v1715 = vand.u32 2147483647, %v161
        %vm1716 = vcmp.le.f32.partialorder %v1715, 0.7853982
        %vm1717 = vcmp.lt.s32.totalorder %v161, 0
        %v1718 = vand.u32 %v161, 2139095040
        %v1719 = vshrl.u32 %v1718, 23
        %v1720 = vsub.s32 %v1719, 127
        %v1721 = vand.u32 2147483647, %v161
        %v1722 = vand.u32 %v1721, 8388607
        %v1723 = vor.u32 %v1722, 8388608
        %v1724 = vsub.s32 0, %v1723
        %v1725 = vadd.s32 %v1720, 1
        %vm1726 = vcmp.gt.s32.totalorder %v1725, 0
        %v1727 = vsel %vm1726, %v1725, 0
        %v1728 = vshrl.u32 %v1727, 5
        %v1729 = vand.u32 %v1727, 31
        %v1730 = vsub.s32 32, %v1729
        %v1731 = vshrl.u32 683565275, %v1730
        %v1732 = vshll.u32 683565275, %v1729
        %v1733 = vshrl.u32 2475754826, %v1730
        %v1734 = vor.u32 %v1732, %v1733
        %v1735 = vshll.u32 2475754826, %v1729
        %v1736 = vshrl.u32 2131351028, %v1730
        %v1737 = vor.u32 %v1735, %v1736
        %v1738 = vshll.u32 2131351028, %v1729
        %v1739 = vshrl.u32 2102212464, %v1730
        %v1740 = vor.u32 %v1738, %v1739
        %v1741 = vshll.u32 2102212464, %v1729
        %v1742 = vshrl.u32 920167782, %v1730
        %v1743 = vor.u32 %v1741, %v1742
        %v1744 = vshll.u32 920167782, %v1729
        %v1745 = vshrl.u32 1326507024, %v1730
        %v1746 = vor.u32 %v1744, %v1745
        %vm1747 = vcmp.lt.s32.totalorder %v1728, 1
        %vm1748 = vcmp.lt.s32.totalorder %v1728, 2
        %vm1749 = vcmp.lt.s32.totalorder %v1728, 3
        %vm1750 = vcmp.lt.s32.totalorder %v1728, 4
        %v1751 = vsel %vm1747, %v1731, %v1734
        %v1752 = vsel %vm1750, %v1740, 2102212464
        %v1753 = vsel %vm1749, %v1737, %v1752
        %v1754 = vsel %vm1748, %v1751, %v1753
        %v1755 = vsel %vm1747, %v1734, %v1737
        %v1756 = vsel %vm1750, %v1743, 920167782
        %v1757 = vsel %vm1749, %v1740, %v1756
        %v1758 = vsel %vm1748, %v1755, %v1757
        %v1759 = vsel %vm1747, %v1737, %v1740
        %v1760 = vsel %vm1750, %v1746, 1326507024
        %v1761 = vsel %vm1749, %v1743, %v1760
        %v1762 = vsel %vm1748, %v1759, %v1761
        %v1763 = vshll.u32 %v1723, 8
        %v1764 = vmul.u32.u64.compose %v1763, %v1762
        %v1765 = vextract.low.u32 %v1764
        %v1766 = vextract.high.u32 %v1764
        %v1767 = vmul.u32.u64.compose %v1763, %v1758
        %v1768 = vextract.low.u32 %v1767
        %v1769 = vextract.high.u32 %v1767
        %v1770 = vmul.u32 %v1763, %v1754
        %v1771 = vadd.s32 %v1766, %v1768
        %vm1772 = vc.u32 %v1766, %v1768
        %v1773 = vadd.s32 %v1769, 1
        %v1774 = vsel %vm1772, %v1773, %v1769
        %v1775 = vadd.s32 %v1770, %v1774
        %v1776 = vadd.s32 %v1775, 536870912
        %v1777 = vshrl.u32 %v1776, 30
        %v1778 = vshll.u32 %v1777, 30
        %v1779 = vsub.s32 %v1775, %v1778
        %vm1780 = vcmp.lt.s32.totalorder %v1779, 0
        %v1781 = vsub.s32 0, %v1779
        %v1782 = vsel %vm1780, %v1781, %v1779
        %v1783 = vclz %v1782
        %v1784 = vsub.s32 %v1783, 2
        %vm1785 = vcmp.gt.s32.totalorder 0, %v1784
        %v1786 = vsel %vm1785, 0, %v1784
        %v1787 = vsub.s32 32, %v1786
        %v1788 = vshll.u32 %v1779, %v1786
        %v1789 = vshrl.u32 %v1771, %v1787
        %v1790 = vor.u32 %v1788, %v1789
        %v1791 = vsub.s32 4294967266, %v1786
        %v1792 = vadd.s32 %v1791, 127
        %v1793 = vshll.u32 %v1792, 23
        %v1794 = vor.u32 4788187, %v1793
        %v1795 = vand.u32 2147483647, %v1794
        %v1797 = vcvt.s32.f32 %v1790
        %v1798 = vmul.f32 %v1797, %v1795
        %v1799 = vxor.u32 %v1798, 2147483648
        %v1800 = vsel %vm1717, %v1799, %v1798
        %v1801 = vsub.s32 4, %v1777
        %v1802 = vsel %vm1717, %v1801, %v1777
        %v1803 = vsel %vm1716, %v161, %v1800
        %v1804 = vsel %vm1716, 0, %v1802
        %v1805 = vcosq.f32.pop %v1803
        %v1806 = vsinq.f32.pop %v1803
        %vm1807 = vweird.f32 %v161
        %v1808 = vand.u32 %v1804, 3
        %vm1809 = vcmp.lt.s32.totalorder %v1808, 2
        %vm1810 = vcmp.eq.s32.totalorder %v1808, 0
        %v1811 = vxor.u32 %v1806, 2147483648
        %v1812 = vsel %vm1810, %v1805, %v1811
        %vm1813 = vcmp.eq.s32.totalorder %v1808, 2
        %v1814 = vxor.u32 %v1805, 2147483648
        %v1815 = vsel %vm1813, %v1814, %v1806
        %v1816 = vsel %vm1809, %v1812, %v1815
        %v1817 = vsel %vm1807, nan, %v1816
        %s1818 = scalar_lea.vmem %s135, 64 [#allocation5]
        %1819 = vst [vmem:[%s1818] sm:$0xff] %v265
        %1820 = vst [vmem:[%s1818 + $0x8] sm:$0xff] %v369
        %1821 = vst [vmem:[%s1818 + $0x10] sm:$0xff] %v473
        %1822 = vst [vmem:[%s1818 + $0x18] sm:$0xff] %v577
        %1823 = vst [vmem:[%s1818 + $0x20] sm:$0xff] %v681
        %1824 = vst [vmem:[%s1818 + $0x28] sm:$0xff] %v785
        %1825 = vst [vmem:[%s1818 + $0x30] sm:$0xff] %v889
        %1826 = vst [vmem:[%s1818 + $0x38] sm:$0xff] %v993
        %s1827 = scalar_lea.vmem %s135, 128 [#allocation5]
        %1828 = vst [vmem:[%s1827] sm:$0xff] %v1096
        %1829 = vst [vmem:[%s1827 + $0x8] sm:$0xff] %v1199
        %1830 = vst [vmem:[%s1827 + $0x10] sm:$0xff] %v1302
        %1831 = vst [vmem:[%s1827 + $0x18] sm:$0xff] %v1405
        %1832 = vst [vmem:[%s1827 + $0x20] sm:$0xff] %v1508
        %1833 = vst [vmem:[%s1827 + $0x28] sm:$0xff] %v1611
        %1834 = vst [vmem:[%s1827 + $0x30] sm:$0xff] %v1714
        %1835 = vst [vmem:[%s1827 + $0x38] sm:$0xff] %v1817
        %v1836 = vmul.f32 %v265, 2.0
        %v1837 = vmul.f32 %v369, 2.0
        %v1838 = vmul.f32 %v473, 2.0
        %v1839 = vmul.f32 %v577, 2.0
        %v1840 = vmul.f32 %v681, 2.0
        %v1841 = vmul.f32 %v785, 2.0
        %v1842 = vmul.f32 %v889, 2.0
        %v1843 = vmul.f32 %v993, 2.0
        %v1844 = vmul.f32 %v1836, %v1096
        %v1845 = vmul.f32 %v1837, %v1199
        %v1846 = vmul.f32 %v1838, %v1302
        %v1847 = vmul.f32 %v1839, %v1405
        %v1848 = vmul.f32 %v1840, %v1508
        %v1849 = vmul.f32 %v1841, %v1611
        %v1850 = vmul.f32 %v1842, %v1714
        %v1851 = vmul.f32 %v1843, %v1817
        %v1852 = vmul.f32 %v265, %v265
        %v1853 = vmul.f32 %v369, %v369
        %v1854 = vmul.f32 %v473, %v473
        %v1855 = vmul.f32 %v577, %v577
        %v1856 = vmul.f32 %v681, %v681
        %v1857 = vmul.f32 %v785, %v785
        %v1858 = vmul.f32 %v889, %v889
        %v1859 = vmul.f32 %v993, %v993
        %v1860 = vmul.f32 %v1852, 2.0
        %v1861 = vmul.f32 %v1853, 2.0
        %v1862 = vmul.f32 %v1854, 2.0
        %v1863 = vmul.f32 %v1855, 2.0
        %v1864 = vmul.f32 %v1856, 2.0
        %v1865 = vmul.f32 %v1857, 2.0
        %v1866 = vmul.f32 %v1858, 2.0
        %v1867 = vmul.f32 %v1859, 2.0
        %v1868 = vsub.f32 1.0, %v1860
        %v1869 = vsub.f32 1.0, %v1861
        %v1870 = vsub.f32 1.0, %v1862
        %v1871 = vsub.f32 1.0, %v1863
        %v1872 = vsub.f32 1.0, %v1864
        %v1873 = vsub.f32 1.0, %v1865
        %v1874 = vsub.f32 1.0, %v1866
        %v1875 = vsub.f32 1.0, %v1867
        %s1876 = scalar_lea.vmem %s135, 192 [#allocation5]
        %1877 = vst [vmem:[%s1876] sm:$0xff] %v1844
        %1878 = vst [vmem:[%s1876 + $0x8] sm:$0xff] %v1845
        %1879 = vst [vmem:[%s1876 + $0x10] sm:$0xff] %v1846
        %1880 = vst [vmem:[%s1876 + $0x18] sm:$0xff] %v1847
        %1881 = vst [vmem:[%s1876 + $0x20] sm:$0xff] %v1848
        %1882 = vst [vmem:[%s1876 + $0x28] sm:$0xff] %v1849
        %1883 = vst [vmem:[%s1876 + $0x30] sm:$0xff] %v1850
        %1884 = vst [vmem:[%s1876 + $0x38] sm:$0xff] %v1851
        %s1885 = scalar_lea.vmem %s135, 256 [#allocation5]
        %1886 = vst [vmem:[%s1885] sm:$0xff] %v1868
        %1887 = vst [vmem:[%s1885 + $0x8] sm:$0xff] %v1869
        %1888 = vst [vmem:[%s1885 + $0x10] sm:$0xff] %v1870
        %1889 = vst [vmem:[%s1885 + $0x18] sm:$0xff] %v1871
        %1890 = vst [vmem:[%s1885 + $0x20] sm:$0xff] %v1872
        %1891 = vst [vmem:[%s1885 + $0x28] sm:$0xff] %v1873
        %1892 = vst [vmem:[%s1885 + $0x30] sm:$0xff] %v1874
        %1893 = vst [vmem:[%s1885 + $0x38] sm:$0xff] %v1875
        %s1894 = sand.u32 %s52, 1
        %s1895 = scalar_lea.sflag [#allocation4], %s1894
        %s1896 = sand.u32 %s52, 1
        %s1897 = smul.addr %s1896, 320
        %s1898 = scalar_lea.vmem [#allocation5], %s1897
        // Predicated region
        $region29: #{tpu_custom_call.1} parent=23 // pred_check
          %p1899 = pneg %p62
        $region30: #{tpu_custom_call.1} parent=23 // pred_check_branch
          %1901 = sbr.rel (%p1899) target = $region32
        $region31: #{tpu_custom_call.1} parent=23 // pred_region
          #allocation7 [shape = 'u32[6]{0}', space=smem, size = 0x18, scoped, tag = 'DMA stride descriptor']
          %s1902 = smul.u32 2, %s18
          %s1904 = ssub.s32 5120, 5120
          %1905 = vsyncadd %s1895, %s1904
          %s1906 = smul.addr %s1902, 4
          %s1907 = smul.addr %s1906, 128
          %s1908 = scalar_lea.hbm %s1, %s1907
          %s1910 = sshll.u32 1, 14
          %s1911 = sxor.u32 4294967295, %s1910
          %s1914 = sshll.u32 7, 18
          %s1915 = sxor.u32 4294967295, %s1914
          %s1916 = sand.u32 0, %s1915
          %s1918 = sor.u32 %s1916, 0
          %s1920 = sshll.u32 3, 24
          %s1921 = sxor.u32 4294967295, %s1920
          %s1922 = sand.u32 %s1918, %s1921
          %s1924 = sor.u32 %s1922, 0
          %s1925 = sshll.u32 %s1898, 4
          %s1926 = int_to_ptr.vmem [resolvable:$true] %s1925
          %1932 = sst [smem:[#allocation7]] 1024
          %s1933 = scalar_lea.smem [#allocation7], 1
          %1934 = sst [smem:[%s1933]] 2048
          %s1935 = scalar_lea.smem [#allocation7], 2
          %1936 = sst [smem:[%s1935]] 2
          %s1937 = scalar_lea.smem [#allocation7], 3
          %1938 = sst [smem:[%s1937]] 512
          %s1939 = scalar_lea.smem [#allocation7], 4
          %1940 = sst [smem:[%s1939]] 512
          %s1941 = scalar_lea.smem [#allocation7], 5
          %1942 = sst [smem:[%s1941]] 32
          %1944 = dma.general %s1926, 5120, %s1908, %s1895, [#allocation6], [#allocation7], %s1924, 0
        $region32: #{tpu_custom_call.1} parent=23 // pred_fallthru
          _
      $region24: #{tpu_custom_call.1} parent=5 // pred_fallthru
        _
      %p1945 = scmp.le.s32.totalorder 2, %s13
      // Predicated region
      $region33: #{tpu_custom_call.1} parent=5 // pred_check
        %p1946 = pneg %p1945
      $region34: #{tpu_custom_call.1} parent=5 // pred_check_branch
        %1948 = sbr.rel (%p1946) target = $region36
      $region35: #{tpu_custom_call.1} parent=5 // pred_region
        %s1949 = ssub.s32 %s13, 2
        // Predicated region
        $region37: #{tpu_custom_call.1} parent=35 // pred_check
          %p1950 = pneg %p68
        $region38: #{tpu_custom_call.1} parent=35 // pred_check_branch
          %1952 = sbr.rel (%p1950) target = $region40
        $region39: #{tpu_custom_call.1} parent=35 // pred_region
          %s1953 = sand.u32 %s53, 1
          %s1954 = scalar_lea.sflag [#allocation4], %s1953
          %s1955 = sand.u32 %s53, 1
          %s1956 = smul.addr %s1955, 320
          %s1957 = scalar_lea.vmem [#allocation5], %s1956
          %1958 = dma.done %s1954, 5120
        $region40: #{tpu_custom_call.1} parent=35 // pred_fallthru
          _
      $region36: #{tpu_custom_call.1} parent=5 // pred_fallthru
        _
    $region6: #{tpu_custom_call.1} parent=1 // loop_footer
      %s17 = sadd.s32 1, %s13
    $region7: #{tpu_custom_call.1} parent=1 // loop_footer_branch
      %12 = sbr.rel target = $region3
    $region8: #{tpu_custom_call.1} parent=1 // loop_exit
      _
    %1959 = vsyncpa [#allocation3], 1
    %s1960 = scalar_lea.sflag [#allocation3], 1
    %1961 = vsyncpa %s1960, 1
    %1962 = vsyncpa [#allocation4], 1
    %s1963 = scalar_lea.sflag [#allocation4], 1
    %1964 = vsyncpa %s1963, 1

</llo_original>
